<compile_context>
chip_gen: v6e
topology: v6e:2x2x1
jax: 0.10.0
libtpu: 0.0.40
codegen_flags: <defaults>
</compile_context>

<pallas_src>
import functools

import jax
import jax.numpy as jnp
from jax.experimental import pallas as pl
from jax.experimental.pallas import tpu as pltpu


# ------------------- Fused MaxPool2x2 + (Conv3x3+BN+ReLU) x2 -----------------

def _down_fused_kernel(x_ref, w1_ref, s1_ref, b1_ref, w2t_ref, s2_ref, b2_ref,
                       o_ref, xpad_ref, hpad_ref, *, Hp, Wp):
    # x_ref   : (1, 2*Hp, 2*Wp, Cin)   NHWC input tile for one batch element
    # w1_ref  : (9*Cin,  Cmid)         conv1 weights, im2col layout (dy,dx,cin)
    # s1_ref  : (1, Cmid)  b1_ref: (1, Cmid)    folded BN1 scale / bias
    # w2t_ref : (Cout, 9*Cmid)         conv2 weights, transposed im2col layout
    # s2_ref  : (Cout, 1)  b2_ref: (Cout, 1)    folded BN2 scale / bias
    # o_ref   : (1, Cout, Hp*Wp)       channels-major output (NCHW for free)
    # xpad_ref: VMEM (Hp+2, Wp+2, Cin)  zero-padded pooled activation (scratch)
    # hpad_ref: VMEM (Hp+2, Wp+2, Cmid) zero-padded hidden activation (scratch)
    Cin = x_ref.shape[-1]
    Cmid = w1_ref.shape[-1]

    # Zero the halo scratch buffers; interiors are fully overwritten below.
    # (Done every step so correctness does not depend on which TensorCore a
    # given grid index lands on under "parallel" megacore sharding.)
    xpad_ref[...] = jnp.zeros_like(xpad_ref)
    hpad_ref[...] = jnp.zeros_like(hpad_ref)

    # ---------------- MaxPool 2x2 (stays entirely in VMEM/vregs) -------------
    x = x_ref[0]                                      # (2Hp, 2Wp, Cin)
    xr = x.reshape(Hp, 2, Wp, 2, Cin)
    pooled = jnp.max(jnp.max(xr, axis=3), axis=1)     # (Hp, Wp, Cin)
    # TODO(synk): switch to strided-view / pltpu.roll pooling if this small
    #             reshape ever shows up in bundle profiles (it is KBs of work).

    # ---------------- conv1: halo pad -> im2col -> ONE matmul ----------------
    xpad_ref[pl.ds(1, Hp), pl.ds(1, Wp), :] = pooled
    xp = xpad_ref[...]                                # (Hp+2, Wp+2, Cin)
    taps = [xp[dy:dy + Hp, dx:dx + Wp, :].reshape(Hp * Wp, Cin)
            for dy in range(3) for dx in range(3)]
    col1 = jnp.concatenate(taps, axis=1)              # (Hp*Wp, 9*Cin)
    h = jnp.dot(col1, w1_ref[...], preferred_element_type=jnp.float32)
    h = jnp.maximum(h * s1_ref[...] + b1_ref[...], 0.0)   # BN (eval) + ReLU

    # ---------------- conv2: same, contracted against transposed weights -----
    hpad_ref[pl.ds(1, Hp), pl.ds(1, Wp), :] = h.reshape(Hp, Wp, Cmid)
    hp = hpad_ref[...]                                # (Hp+2, Wp+2, Cmid)
    taps = [hp[dy:dy + Hp, dx:dx + Wp, :].reshape(Hp * Wp, Cmid)
            for dy in range(3) for dx in range(3)]
    col2 = jnp.concatenate(taps, axis=1)              # (Hp*Wp, 9*Cmid)
    # (Cout, 9*Cmid) x (Hp*Wp, 9*Cmid)^T -> (Cout, Hp*Wp); q@k.T-style
    # dot_general so no transpose is ever materialized.
    y = jax.lax.dot_general(w2t_ref[...], col2,
                            dimension_numbers=(((1,), (1,)), ((), ())),
                            preferred_element_type=jnp.float32)
    y = jnp.maximum(y * s2_ref[...] + b2_ref[...], 0.0)   # BN (eval) + ReLU
    o_ref[0] = y.astype(o_ref.dtype)                  # lane-dense minor dim


def down_forward(x_nchw, params):
    """NCHW float32 input -> NCHW output, matching PyTorch `down` (eval BN)."""
    (w1, s1, b1), (w2, s2, b2) = params
    N, Cin, H, W = x_nchw.shape
    assert H % 2 == 0 and W % 2 == 0, "MaxPool2d(2) requires even H and W"
    Hp, Wp = H // 2, W // 2
    Cmid = w1.shape[-1]
    Cout = w2.shape[-1]
    assert w1.shape == (3, 3, Cin, Cmid) and w2.shape == (3, 3, Cmid, Cout)

    x = jnp.transpose(x_nchw, (0, 2, 3, 1))            # NCHW -> NHWC
    w1f = w1.reshape(9 * Cin, Cmid).astype(jnp.float32)           # (9*Cin, Cmid)
    w2t = w2.reshape(9 * Cmid, Cout).T.astype(jnp.float32)        # (Cout, 9*Cmid)
    s1r = s1.reshape(1, Cmid).astype(jnp.float32)
    b1r = b1.reshape(1, Cmid).astype(jnp.float32)
    s2r = s2.reshape(Cout, 1).astype(jnp.float32)
    b2r = b2.reshape(Cout, 1).astype(jnp.float32)

    kernel = functools.partial(_down_fused_kernel, Hp=Hp, Wp=Wp)
    out = pl.pallas_call(
        kernel,
        out_shape=jax.ShapeDtypeStruct((N, Cout, Hp * Wp), x.dtype),
        grid=(N,),
        in_specs=[
            pl.BlockSpec((1, H, W, Cin), lambda n: (n, 0, 0, 0)),
            pl.BlockSpec((9 * Cin, Cmid), lambda n: (0, 0)),
            pl.BlockSpec((1, Cmid), lambda n: (0, 0)),
            pl.BlockSpec((1, Cmid), lambda n: (0, 0)),
            pl.BlockSpec((Cout, 9 * Cmid), lambda n: (0, 0)),
            pl.BlockSpec((Cout, 1), lambda n: (0, 0)),
            pl.BlockSpec((Cout, 1), lambda n: (0, 0)),
        ],
        out_specs=pl.BlockSpec((1, Cout, Hp * Wp), lambda n: (n, 0, 0)),
        scratch_shapes=[
            pltpu.VMEM((Hp + 2, Wp + 2, Cin), jnp.float32),
            pltpu.VMEM((Hp + 2, Wp + 2, Cmid), jnp.float32),
        ],
        compiler_params=pltpu.CompilerParams(
            dimension_semantics=("parallel",)),
    )(x, w1f, s1r, b1r, w2t, s2r, b2r)

    # Output is already channels-major: only a free reshape to NCHW remains.
    return out.reshape(N, Cout, Hp, Wp)


# ----------------------------- Parameter setup --------------------------------

def _fold_bn(conv_b, gamma, beta, running_mean, running_var, eps=1e-5):
    s = gamma / jnp.sqrt(running_var + eps)
    b = (conv_b - running_mean) * s + beta
    return s, b


def init_conv_bn(key, in_ch, out_ch):
    """Deterministic init mimicking PyTorch Conv2d default + random-ish BN."""
    k_w, k_b, k_g, k_be, k_m, k_v = jax.random.split(key, 6)
    fan_in = in_ch * 3 * 3
    bound = 1.0 / jnp.sqrt(fan_in)
    w = jax.random.uniform(k_w, (3, 3, in_ch, out_ch), jnp.float32,
                           -bound, bound)               # HWIO
    conv_b = jax.random.uniform(k_b, (out_ch,), jnp.float32, -bound, bound)
    gamma = 1.0 + 0.1 * jax.random.normal(k_g, (out_ch,), jnp.float32)
    beta = 0.1 * jax.random.normal(k_be, (out_ch,), jnp.float32)
    running_mean = 0.1 * jax.random.normal(k_m, (out_ch,), jnp.float32)
    running_var = 1.0 + 0.1 * jax.random.uniform(k_v, (out_ch,), jnp.float32)
    scale, bias = _fold_bn(conv_b, gamma, beta, running_mean, running_var)
    return w, scale, bias


def init_down_params(key, in_ch, out_ch):
    k1, k2 = jax.random.split(key)
    return [init_conv_bn(k1, in_ch, out_ch),
            init_conv_bn(k2, out_ch, out_ch)]


# ----------------------------- Pure-JAX reference ------------------------------

def down_reference(x_nchw, params):
    x = jnp.transpose(x_nchw, (0, 2, 3, 1))
    x = jax.lax.reduce_window(x, -jnp.inf, jax.lax.max,
                              (1, 2, 2, 1), (1, 2, 2, 1), "VALID")
    for (w, scale, bias) in params:
        z = jax.lax.conv_general_dilated(
            x, w, (1, 1), "SAME",
            dimension_numbers=("NHWC", "HWIO", "NHWC"))
        x = jnp.maximum(z * scale + bias, 0.0)
    return jnp.transpose(x, (0, 3, 1, 2))


# ----------------------------------- Main ---------------------------------------

if __name__ == "__main__":
    key = jax.random.PRNGKey(0)
    k_x, k_p = jax.random.split(key)

    N, Cin, H, W = 2, 4, 16, 16
    Cout = 8

    x = jax.random.normal(k_x, (N, Cin, H, W), jnp.float32)
    params = init_down_params(k_p, Cin, Cout)

    y = jax.block_until_ready(down_forward(x, params))
    y_ref = down_reference(x, params)

    assert y.shape == (N, Cout, H // 2, W // 2), y.shape
    assert jnp.allclose(y, y_ref, atol=1e-3, rtol=1e-3), (
        float(jnp.max(jnp.abs(y - y_ref))))

    print("KERNEL_OK")
</pallas_src>

<mosaic_0001>
module attributes {stable_mosaic.version = 11 : i64} {
  func.func @_down_fused_kernel(%arg0: i32, %arg1: memref<1x16x16x4xf32, #tpu.memory_space<vmem>>, %arg2: memref<36x8xf32, #tpu.memory_space<vmem>>, %arg3: memref<1x8xf32, #tpu.memory_space<vmem>>, %arg4: memref<1x8xf32, #tpu.memory_space<vmem>>, %arg5: memref<8x72xf32, #tpu.memory_space<vmem>>, %arg6: memref<8x1xf32, #tpu.memory_space<vmem>>, %arg7: memref<8x1xf32, #tpu.memory_space<vmem>>, %arg8: memref<1x8x64xf32, #tpu.memory_space<vmem>>, %arg9: memref<10x10x4xf32, #tpu.memory_space<vmem>>, %arg10: memref<10x10x8xf32, #tpu.memory_space<vmem>>) attributes {dimension_semantics = [#tpu.dimension_semantics<parallel>], iteration_bounds = array<i64: 2>, scalar_prefetch = 0 : i64, scratch_operands = 2 : i64, tpu.core_type = #tpu.core_type<tc>, window_params = [{transform_indices = @transform_0, window_bounds = array<i64: 1, 16, 16, 4>}, {pipeline_mode = #tpu.pipeline_mode<synchronous>, transform_indices = @transform_1, window_bounds = array<i64: 36, 8>}, {pipeline_mode = #tpu.pipeline_mode<synchronous>, transform_indices = @transform_2, window_bounds = array<i64: 1, 8>}, {pipeline_mode = #tpu.pipeline_mode<synchronous>, transform_indices = @transform_3, window_bounds = array<i64: 1, 8>}, {pipeline_mode = #tpu.pipeline_mode<synchronous>, transform_indices = @transform_4, window_bounds = array<i64: 8, 72>}, {pipeline_mode = #tpu.pipeline_mode<synchronous>, transform_indices = @transform_5, window_bounds = array<i64: 8, 1>}, {pipeline_mode = #tpu.pipeline_mode<synchronous>, transform_indices = @transform_6, window_bounds = array<i64: 8, 1>}, {transform_indices = @transform_7, window_bounds = array<i64: 1, 8, 64>}]} {
    %cst = arith.constant 0.000000e+00 : f32
    %0 = vector.broadcast %cst : f32 to vector<10x10x4xf32>
    %c0 = arith.constant 0 : index
    %c0_0 = arith.constant 0 : index
    %c0_1 = arith.constant 0 : index
    %1 = vector.load %arg9[%c0, %c0_0, %c0_1] : memref<10x10x4xf32, #tpu.memory_space<vmem>>, vector<10x10x4xf32>
    tpu.vector_store %arg9[%c0, %c0_0, %c0_1], %0 {strides = array<i32>} : memref<10x10x4xf32, #tpu.memory_space<vmem>>, vector<10x10x4xf32>,
    %cst_2 = arith.constant 0.000000e+00 : f32
    %2 = vector.broadcast %cst_2 : f32 to vector<10x10x8xf32>
    %c0_3 = arith.constant 0 : index
    %c0_4 = arith.constant 0 : index
    %c0_5 = arith.constant 0 : index
    %3 = vector.load %arg10[%c0_3, %c0_4, %c0_5] : memref<10x10x8xf32, #tpu.memory_space<vmem>>, vector<10x10x8xf32>
    tpu.vector_store %arg10[%c0_3, %c0_4, %c0_5], %2 {strides = array<i32>} : memref<10x10x8xf32, #tpu.memory_space<vmem>>, vector<10x10x8xf32>,
    %c0_6 = arith.constant 0 : index
    %c0_7 = arith.constant 0 : index
    %c0_8 = arith.constant 0 : index
    %c0_9 = arith.constant 0 : index
    %4 = vector.load %arg1[%c0_6, %c0_7, %c0_8, %c0_9] : memref<1x16x16x4xf32, #tpu.memory_space<vmem>>, vector<1x16x16x4xf32>
    %5 = vector.shape_cast %4 : vector<1x16x16x4xf32> to vector<16x16x4xf32>
    %6 = vector.shape_cast %5 : vector<16x16x4xf32> to vector<8x2x8x2x4xf32>
    %cst_10 = arith.constant dense<0xFF800000> : vector<8x2x8x4xf32>
    %7 = vector.multi_reduction <maximumf>, %6, %cst_10 [3] : vector<8x2x8x2x4xf32> to vector<8x2x8x4xf32>
    %cst_11 = arith.constant dense<0xFF800000> : vector<8x8x4xf32>
    %8 = vector.multi_reduction <maximumf>, %7, %cst_11 [1] : vector<8x2x8x4xf32> to vector<8x8x4xf32>
    %c1 = arith.constant 1 : index
    %c1_12 = arith.constant 1 : index
    %c0_13 = arith.constant 0 : index
    %9 = vector.load %arg9[%c1, %c1_12, %c0_13] : memref<10x10x4xf32, #tpu.memory_space<vmem>>, vector<8x8x4xf32>
    tpu.vector_store %arg9[%c1, %c1_12, %c0_13], %8 {strides = array<i32>} : memref<10x10x4xf32, #tpu.memory_space<vmem>>, vector<8x8x4xf32>,
    %c0_14 = arith.constant 0 : index
    %c0_15 = arith.constant 0 : index
    %c0_16 = arith.constant 0 : index
    %10 = vector.load %arg9[%c0_14, %c0_15, %c0_16] : memref<10x10x4xf32, #tpu.memory_space<vmem>>, vector<10x10x4xf32>
    %11 = vector.extract_strided_slice %10 {offsets = [0, 0, 0], sizes = [8, 8, 4], strides = [1, 1, 1]} : vector<10x10x4xf32> to vector<8x8x4xf32>
    %12 = vector.shape_cast %11 : vector<8x8x4xf32> to vector<64x4xf32>
    %13 = vector.extract_strided_slice %10 {offsets = [0, 1, 0], sizes = [8, 8, 4], strides = [1, 1, 1]} : vector<10x10x4xf32> to vector<8x8x4xf32>
    %14 = vector.shape_cast %13 : vector<8x8x4xf32> to vector<64x4xf32>
    %15 = vector.extract_strided_slice %10 {offsets = [0, 2, 0], sizes = [8, 8, 4], strides = [1, 1, 1]} : vector<10x10x4xf32> to vector<8x8x4xf32>
    %16 = vector.shape_cast %15 : vector<8x8x4xf32> to vector<64x4xf32>
    %17 = vector.extract_strided_slice %10 {offsets = [1, 0, 0], sizes = [8, 8, 4], strides = [1, 1, 1]} : vector<10x10x4xf32> to vector<8x8x4xf32>
    %18 = vector.shape_cast %17 : vector<8x8x4xf32> to vector<64x4xf32>
    %19 = vector.extract_strided_slice %10 {offsets = [1, 1, 0], sizes = [8, 8, 4], strides = [1, 1, 1]} : vector<10x10x4xf32> to vector<8x8x4xf32>
    %20 = vector.shape_cast %19 : vector<8x8x4xf32> to vector<64x4xf32>
    %21 = vector.extract_strided_slice %10 {offsets = [1, 2, 0], sizes = [8, 8, 4], strides = [1, 1, 1]} : vector<10x10x4xf32> to vector<8x8x4xf32>
    %22 = vector.shape_cast %21 : vector<8x8x4xf32> to vector<64x4xf32>
    %23 = vector.extract_strided_slice %10 {offsets = [2, 0, 0], sizes = [8, 8, 4], strides = [1, 1, 1]} : vector<10x10x4xf32> to vector<8x8x4xf32>
    %24 = vector.shape_cast %23 : vector<8x8x4xf32> to vector<64x4xf32>
    %25 = vector.extract_strided_slice %10 {offsets = [2, 1, 0], sizes = [8, 8, 4], strides = [1, 1, 1]} : vector<10x10x4xf32> to vector<8x8x4xf32>
    %26 = vector.shape_cast %25 : vector<8x8x4xf32> to vector<64x4xf32>
    %27 = vector.extract_strided_slice %10 {offsets = [2, 2, 0], sizes = [8, 8, 4], strides = [1, 1, 1]} : vector<10x10x4xf32> to vector<8x8x4xf32>
    %28 = vector.shape_cast %27 : vector<8x8x4xf32> to vector<64x4xf32>
    %29 = tpu.concatenate %12, %14, %16, %18, %20, %22, %24, %26, %28 in 1 : vector<64x4xf32>, vector<64x4xf32>, vector<64x4xf32>, vector<64x4xf32>, vector<64x4xf32>, vector<64x4xf32>, vector<64x4xf32>, vector<64x4xf32>, vector<64x4xf32> -> vector<64x36xf32>
    %c0_17 = arith.constant 0 : index
    %c0_18 = arith.constant 0 : index
    %30 = vector.load %arg2[%c0_17, %c0_18] : memref<36x8xf32, #tpu.memory_space<vmem>>, vector<36x8xf32>
    %cst_19 = arith.constant dense<0.000000e+00> : vector<64x8xf32>
    %31 = tpu.matmul %29, %30, %cst_19 {dimension_numbers = #tpu.dot_dimension_numbers<[1], [0], [0], [1], [0, 0, 1, 1], [], []>} : vector<64x36xf32>, vector<36x8xf32>, vector<64x8xf32> -> vector<64x8xf32>
    %c0_20 = arith.constant 0 : index
    %c0_21 = arith.constant 0 : index
    %32 = vector.load %arg3[%c0_20, %c0_21] : memref<1x8xf32, #tpu.memory_space<vmem>>, vector<1x8xf32>
    %33 = vector.broadcast %32 : vector<1x8xf32> to vector<64x8xf32>
    %34 = arith.mulf %31, %33 : vector<64x8xf32>
    %c0_22 = arith.constant 0 : index
    %c0_23 = arith.constant 0 : index
    %35 = vector.load %arg4[%c0_22, %c0_23] : memref<1x8xf32, #tpu.memory_space<vmem>>, vector<1x8xf32>
    %36 = vector.broadcast %35 : vector<1x8xf32> to vector<64x8xf32>
    %37 = arith.addf %34, %36 : vector<64x8xf32>
    %cst_24 = arith.constant 0.000000e+00 : f32
    %38 = vector.broadcast %cst_24 : f32 to vector<64x8xf32>
    %39 = arith.maximumf %37, %38 : vector<64x8xf32>
    %40 = vector.shape_cast %39 : vector<64x8xf32> to vector<8x8x8xf32>
    %c1_25 = arith.constant 1 : index
    %c1_26 = arith.constant 1 : index
    %c0_27 = arith.constant 0 : index
    %41 = vector.load %arg10[%c1_25, %c1_26, %c0_27] : memref<10x10x8xf32, #tpu.memory_space<vmem>>, vector<8x8x8xf32>
    tpu.vector_store %arg10[%c1_25, %c1_26, %c0_27], %40 {strides = array<i32>} : memref<10x10x8xf32, #tpu.memory_space<vmem>>, vector<8x8x8xf32>,
    %c0_28 = arith.constant 0 : index
    %c0_29 = arith.constant 0 : index
    %c0_30 = arith.constant 0 : index
    %42 = vector.load %arg10[%c0_28, %c0_29, %c0_30] : memref<10x10x8xf32, #tpu.memory_space<vmem>>, vector<10x10x8xf32>
    %43 = vector.extract_strided_slice %42 {offsets = [0, 0, 0], sizes = [8, 8, 8], strides = [1, 1, 1]} : vector<10x10x8xf32> to vector<8x8x8xf32>
    %44 = vector.shape_cast %43 : vector<8x8x8xf32> to vector<64x8xf32>
    %45 = vector.extract_strided_slice %42 {offsets = [0, 1, 0], sizes = [8, 8, 8], strides = [1, 1, 1]} : vector<10x10x8xf32> to vector<8x8x8xf32>
    %46 = vector.shape_cast %45 : vector<8x8x8xf32> to vector<64x8xf32>
    %47 = vector.extract_strided_slice %42 {offsets = [0, 2, 0], sizes = [8, 8, 8], strides = [1, 1, 1]} : vector<10x10x8xf32> to vector<8x8x8xf32>
    %48 = vector.shape_cast %47 : vector<8x8x8xf32> to vector<64x8xf32>
    %49 = vector.extract_strided_slice %42 {offsets = [1, 0, 0], sizes = [8, 8, 8], strides = [1, 1, 1]} : vector<10x10x8xf32> to vector<8x8x8xf32>
    %50 = vector.shape_cast %49 : vector<8x8x8xf32> to vector<64x8xf32>
    %51 = vector.extract_strided_slice %42 {offsets = [1, 1, 0], sizes = [8, 8, 8], strides = [1, 1, 1]} : vector<10x10x8xf32> to vector<8x8x8xf32>
    %52 = vector.shape_cast %51 : vector<8x8x8xf32> to vector<64x8xf32>
    %53 = vector.extract_strided_slice %42 {offsets = [1, 2, 0], sizes = [8, 8, 8], strides = [1, 1, 1]} : vector<10x10x8xf32> to vector<8x8x8xf32>
    %54 = vector.shape_cast %53 : vector<8x8x8xf32> to vector<64x8xf32>
    %55 = vector.extract_strided_slice %42 {offsets = [2, 0, 0], sizes = [8, 8, 8], strides = [1, 1, 1]} : vector<10x10x8xf32> to vector<8x8x8xf32>
    %56 = vector.shape_cast %55 : vector<8x8x8xf32> to vector<64x8xf32>
    %57 = vector.extract_strided_slice %42 {offsets = [2, 1, 0], sizes = [8, 8, 8], strides = [1, 1, 1]} : vector<10x10x8xf32> to vector<8x8x8xf32>
    %58 = vector.shape_cast %57 : vector<8x8x8xf32> to vector<64x8xf32>
    %59 = vector.extract_strided_slice %42 {offsets = [2, 2, 0], sizes = [8, 8, 8], strides = [1, 1, 1]} : vector<10x10x8xf32> to vector<8x8x8xf32>
    %60 = vector.shape_cast %59 : vector<8x8x8xf32> to vector<64x8xf32>
    %61 = tpu.concatenate %44, %46, %48, %50, %52, %54, %56, %58, %60 in 1 : vector<64x8xf32>, vector<64x8xf32>, vector<64x8xf32>, vector<64x8xf32>, vector<64x8xf32>, vector<64x8xf32>, vector<64x8xf32>, vector<64x8xf32>, vector<64x8xf32> -> vector<64x72xf32>
    %c0_31 = arith.constant 0 : index
    %c0_32 = arith.constant 0 : index
    %62 = vector.load %arg5[%c0_31, %c0_32] : memref<8x72xf32, #tpu.memory_space<vmem>>, vector<8x72xf32>
    %cst_33 = arith.constant dense<0.000000e+00> : vector<8x64xf32>
    %63 = tpu.matmul %62, %61, %cst_33 {dimension_numbers = #tpu.dot_dimension_numbers<[1], [1], [0], [0], [0, 0, 1, 0], [], []>} : vector<8x72xf32>, vector<64x72xf32>, vector<8x64xf32> -> vector<8x64xf32>
    %c0_34 = arith.constant 0 : index
    %c0_35 = arith.constant 0 : index
    %64 = vector.load %arg6[%c0_34, %c0_35] : memref<8x1xf32, #tpu.memory_space<vmem>>, vector<8x1xf32>
    %65 = vector.broadcast %64 : vector<8x1xf32> to vector<8x64xf32>
    %66 = arith.mulf %63, %65 : vector<8x64xf32>
    %c0_36 = arith.constant 0 : index
    %c0_37 = arith.constant 0 : index
    %67 = vector.load %arg7[%c0_36, %c0_37] : memref<8x1xf32, #tpu.memory_space<vmem>>, vector<8x1xf32>
    %68 = vector.broadcast %67 : vector<8x1xf32> to vector<8x64xf32>
    %69 = arith.addf %66, %68 : vector<8x64xf32>
    %cst_38 = arith.constant 0.000000e+00 : f32
    %70 = vector.broadcast %cst_38 : f32 to vector<8x64xf32>
    %71 = arith.maximumf %69, %70 : vector<8x64xf32>
    %c0_39 = arith.constant 0 : index
    %c0_40 = arith.constant 0 : index
    %c0_41 = arith.constant 0 : index
    %72 = vector.load %arg8[%c0_39, %c0_40, %c0_41] : memref<1x8x64xf32, #tpu.memory_space<vmem>>, vector<1x8x64xf32>
    %73 = vector.shape_cast %72 : vector<1x8x64xf32> to vector<8x64xf32>
    %74 = vector.shape_cast %71 : vector<8x64xf32> to vector<1x8x64xf32>
    tpu.vector_store %arg8[%c0_39, %c0_40, %c0_41], %74 {strides = array<i32>} : memref<1x8x64xf32, #tpu.memory_space<vmem>>, vector<1x8x64xf32>,
    return
  }
  func.func @transform_0(%arg0: i32) -> (i32, i32, i32, i32) {
    %c0_i32 = arith.constant 0 : i32
    %c0_i32_0 = arith.constant 0 : i32
    %c0_i32_1 = arith.constant 0 : i32
    %c0_i32_2 = arith.constant 0 : i32
    return %arg0, %c0_i32, %c0_i32_0, %c0_i32_1 : i32, i32, i32, i32
  }
  func.func @transform_1(%arg0: i32) -> (i32, i32) {
    %c0_i32 = arith.constant 0 : i32
    %c0_i32_0 = arith.constant 0 : i32
    %c0_i32_1 = arith.constant 0 : i32
    return %c0_i32, %c0_i32_0 : i32, i32
  }
  func.func @transform_2(%arg0: i32) -> (i32, i32) {
    %c0_i32 = arith.constant 0 : i32
    %c0_i32_0 = arith.constant 0 : i32
    %c0_i32_1 = arith.constant 0 : i32
    return %c0_i32, %c0_i32_0 : i32, i32
  }
  func.func @transform_3(%arg0: i32) -> (i32, i32) {
    %c0_i32 = arith.constant 0 : i32
    %c0_i32_0 = arith.constant 0 : i32
    %c0_i32_1 = arith.constant 0 : i32
    return %c0_i32, %c0_i32_0 : i32, i32
  }
  func.func @transform_4(%arg0: i32) -> (i32, i32) {
    %c0_i32 = arith.constant 0 : i32
    %c0_i32_0 = arith.constant 0 : i32
    %c0_i32_1 = arith.constant 0 : i32
    return %c0_i32, %c0_i32_0 : i32, i32
  }
  func.func @transform_5(%arg0: i32) -> (i32, i32) {
    %c0_i32 = arith.constant 0 : i32
    %c0_i32_0 = arith.constant 0 : i32
    %c0_i32_1 = arith.constant 0 : i32
    return %c0_i32, %c0_i32_0 : i32, i32
  }
  func.func @transform_6(%arg0: i32) -> (i32, i32) {
    %c0_i32 = arith.constant 0 : i32
    %c0_i32_0 = arith.constant 0 : i32
    %c0_i32_1 = arith.constant 0 : i32
    return %c0_i32, %c0_i32_0 : i32, i32
  }
  func.func @transform_7(%arg0: i32) -> (i32, i32, i32) {
    %c0_i32 = arith.constant 0 : i32
    %c0_i32_0 = arith.constant 0 : i32
    %c0_i32_1 = arith.constant 0 : i32
    return %arg0, %c0_i32, %c0_i32_0 : i32, i32, i32
  }
}

</mosaic_0001>

<llo_original>
// kernel: tpu_custom_call.1
$region0: #{tpu_custom_call.1}
  #allocation0 [shape = 'u32[]', space=smem, size = 0x4, offset = 0x4, fixed_abs, tag = 'smem constant byte address 0x4 - core index']
  #allocation1 [shape = 'u32[144,128]{1,0:T(1,128)}', space=vmem, size = 0x12000, scoped, tag = 'internal scratch']
  #allocation2 [shape = 'f32[10,10,4]{2,1,0:T(8,128)}', space=vmem, size = 0x14000, scoped, tag = 'scratch operand']
  #allocation3 [shape = 'f32[10,10,8]{2,1,0:T(8,128)}', space=vmem, size = 0x14000, scoped, tag = 'scratch operand']
  %s0 = inlined_call_operand.vmem [shape: f32[2,16,16,4], index: 0, kind: input, shape index: {}]
  %s1 = inlined_call_operand.vmem [shape: f32[36,8], index: 1, kind: input, shape index: {}]
  %s2 = inlined_call_operand.vmem [shape: f32[1,8], index: 2, kind: input, shape index: {}]
  %s3 = inlined_call_operand.vmem [shape: f32[1,8], index: 3, kind: input, shape index: {}]
  %s4 = inlined_call_operand.vmem [shape: f32[8,72], index: 4, kind: input, shape index: {}]
  %s5 = inlined_call_operand.vmem [shape: f32[8,1], index: 5, kind: input, shape index: {}]
  %s6 = inlined_call_operand.vmem [shape: f32[8,1], index: 6, kind: input, shape index: {}]
  %s7 = inlined_call_operand.hbm [shape: f32[2,8,64], index: 7, kind: output, shape index: {}]
  %s8 = sld [smem:[#allocation0]]
  $region61: #{tpu_custom_call.1} parent=0
    _
  %s10 = ssub.s32 1, %s8
  %s11 = scalar_select 0, %s10, %s8
  $region1: #{tpu_custom_call.1} parent=0
    #allocation4 [shape = 'u8[8192]{0}', space=vmem, size = 0x2000, scoped, tag = 'output window, operand 0']
    #allocation5 [shape = 's32[2]{0}', space=sflag, size = 0x8, scoped, tag = 'scoped memory for tpu_custom_call.1']
    %12 = vsyncpa [#allocation5], 0
    %s13 = scalar_lea.sflag [#allocation5], 1
    %14 = vsyncpa %s13, 0
    loop: start=0, step=1, limit=4
    $region2: #{tpu_custom_call.1} parent=1 // loop_pre_header
      _
    $region3: #{tpu_custom_call.1} parent=1 // loop_header
      %s16 = sphi 0, %s20
      %p17 = scmp.ge.s32.totalorder %s16, 4
      %s26 = sphi 0, %s28
      %s29 = sphi 0, %s26
      %s30 = sphi 0, %s29
      %s46 = sphi 0, %s30
      %s50 = sphi 0, %s50
      %s52 = sphi 0, %s50
      %s53 = sphi 0, %s52
      %s67 = sphi 0, %s53
      %s71 = sphi 0, %s71
      %s73 = sphi 0, %s71
      %s74 = sphi 0, %s73
      %s88 = sphi 0, %s74
      %s92 = sphi 0, %s92
      %s94 = sphi 0, %s92
      %s95 = sphi 0, %s94
      %s109 = sphi 0, %s95
      %s113 = sphi 0, %s113
      %s115 = sphi 0, %s113
      %s116 = sphi 0, %s115
      %s130 = sphi 0, %s116
      %s134 = sphi 0, %s134
      %s136 = sphi 0, %s134
      %s137 = sphi 0, %s136
      %s151 = sphi 0, %s137
      %s155 = sphi 0, %s155
      %s157 = sphi 0, %s155
      %s158 = sphi 0, %s157
      %s172 = sphi 0, %s158
      %s178 = sphi 0, %s180
      %s181 = sphi 0, %s178
      %s182 = sphi 0, %s181
      %s198 = sphi 0, %s182
    $region4: #{tpu_custom_call.1} parent=1 // loop_header_branch
      %19 = sbr.rel (%p17) target = $region8
    $region5: #{tpu_custom_call.1} parent=1 // loop_body
      %s21 = ssub.s32 %s16, 1
      %s22 = ssub.s32 %s16, 2
      %s23 = sadd.s32 %s16, 1
      %s24 = ssub.s32 %s16, %s23
      %p25 = scmp.eq.s32.totalorder %s24, 0
      %s27 = sadd.s32 %s26, 1
      %s28 = scalar_select %p25, %s26, %s27
      %p31 = pneg %p25
      %p32 = scmp.eq.s32.totalorder %s16, 1
      %p33 = por %p31, %p32
      %p34 = scmp.ne.s32.totalorder %s26, %s29
      %p35 = scmp.eq.s32.totalorder %s16, 0
      %p36 = por %p34, %p35
      %p37 = scmp.ne.s32.totalorder %s26, %s29
      %p38 = scmp.eq.s32.totalorder %s21, 1
      %p39 = por %p37, %p38
      %p40 = scmp.ne.s32.totalorder %s29, %s30
      %p41 = scmp.eq.s32.totalorder %s21, 0
      %p42 = por %p40, %p41
      %p43 = scmp.ne.s32.totalorder %s29, %s30
      %p44 = scmp.eq.s32.totalorder %s22, 1
      %p45 = por %p43, %p44
      %p47 = scmp.ne.s32.totalorder %s30, %s46
      %p48 = scmp.eq.s32.totalorder %s22, 0
      %p49 = por %p47, %p48
      %s51 = sadd.s32 %s50, 1
      %p54 = scmp.eq.s32.totalorder %s16, 1
      %p55 = scmp.ne.s32.totalorder %s50, %s52
      %p56 = scmp.eq.s32.totalorder %s16, 0
      %p57 = por %p55, %p56
      %p58 = scmp.ne.s32.totalorder %s50, %s52
      %p59 = scmp.eq.s32.totalorder %s21, 1
      %p60 = por %p58, %p59
      %p61 = scmp.ne.s32.totalorder %s52, %s53
      %p62 = scmp.eq.s32.totalorder %s21, 0
      %p63 = por %p61, %p62
      %p64 = scmp.ne.s32.totalorder %s52, %s53
      %p65 = scmp.eq.s32.totalorder %s22, 1
      %p66 = por %p64, %p65
      %p68 = scmp.ne.s32.totalorder %s53, %s67
      %p69 = scmp.eq.s32.totalorder %s22, 0
      %p70 = por %p68, %p69
      %s72 = sadd.s32 %s71, 1
      %p75 = scmp.eq.s32.totalorder %s16, 1
      %p76 = scmp.ne.s32.totalorder %s71, %s73
      %p77 = scmp.eq.s32.totalorder %s16, 0
      %p78 = por %p76, %p77
      %p79 = scmp.ne.s32.totalorder %s71, %s73
      %p80 = scmp.eq.s32.totalorder %s21, 1
      %p81 = por %p79, %p80
      %p82 = scmp.ne.s32.totalorder %s73, %s74
      %p83 = scmp.eq.s32.totalorder %s21, 0
      %p84 = por %p82, %p83
      %p85 = scmp.ne.s32.totalorder %s73, %s74
      %p86 = scmp.eq.s32.totalorder %s22, 1
      %p87 = por %p85, %p86
      %p89 = scmp.ne.s32.totalorder %s74, %s88
      %p90 = scmp.eq.s32.totalorder %s22, 0
      %p91 = por %p89, %p90
      %s93 = sadd.s32 %s92, 1
      %p96 = scmp.eq.s32.totalorder %s16, 1
      %p97 = scmp.ne.s32.totalorder %s92, %s94
      %p98 = scmp.eq.s32.totalorder %s16, 0
      %p99 = por %p97, %p98
      %p100 = scmp.ne.s32.totalorder %s92, %s94
      %p101 = scmp.eq.s32.totalorder %s21, 1
      %p102 = por %p100, %p101
      %p103 = scmp.ne.s32.totalorder %s94, %s95
      %p104 = scmp.eq.s32.totalorder %s21, 0
      %p105 = por %p103, %p104
      %p106 = scmp.ne.s32.totalorder %s94, %s95
      %p107 = scmp.eq.s32.totalorder %s22, 1
      %p108 = por %p106, %p107
      %p110 = scmp.ne.s32.totalorder %s95, %s109
      %p111 = scmp.eq.s32.totalorder %s22, 0
      %p112 = por %p110, %p111
      %s114 = sadd.s32 %s113, 1
      %p117 = scmp.eq.s32.totalorder %s16, 1
      %p118 = scmp.ne.s32.totalorder %s113, %s115
      %p119 = scmp.eq.s32.totalorder %s16, 0
      %p120 = por %p118, %p119
      %p121 = scmp.ne.s32.totalorder %s113, %s115
      %p122 = scmp.eq.s32.totalorder %s21, 1
      %p123 = por %p121, %p122
      %p124 = scmp.ne.s32.totalorder %s115, %s116
      %p125 = scmp.eq.s32.totalorder %s21, 0
      %p126 = por %p124, %p125
      %p127 = scmp.ne.s32.totalorder %s115, %s116
      %p128 = scmp.eq.s32.totalorder %s22, 1
      %p129 = por %p127, %p128
      %p131 = scmp.ne.s32.totalorder %s116, %s130
      %p132 = scmp.eq.s32.totalorder %s22, 0
      %p133 = por %p131, %p132
      %s135 = sadd.s32 %s134, 1
      %p138 = scmp.eq.s32.totalorder %s16, 1
      %p139 = scmp.ne.s32.totalorder %s134, %s136
      %p140 = scmp.eq.s32.totalorder %s16, 0
      %p141 = por %p139, %p140
      %p142 = scmp.ne.s32.totalorder %s134, %s136
      %p143 = scmp.eq.s32.totalorder %s21, 1
      %p144 = por %p142, %p143
      %p145 = scmp.ne.s32.totalorder %s136, %s137
      %p146 = scmp.eq.s32.totalorder %s21, 0
      %p147 = por %p145, %p146
      %p148 = scmp.ne.s32.totalorder %s136, %s137
      %p149 = scmp.eq.s32.totalorder %s22, 1
      %p150 = por %p148, %p149
      %p152 = scmp.ne.s32.totalorder %s137, %s151
      %p153 = scmp.eq.s32.totalorder %s22, 0
      %p154 = por %p152, %p153
      %s156 = sadd.s32 %s155, 1
      %p159 = scmp.eq.s32.totalorder %s16, 1
      %p160 = scmp.ne.s32.totalorder %s155, %s157
      %p161 = scmp.eq.s32.totalorder %s16, 0
      %p162 = por %p160, %p161
      %p163 = scmp.ne.s32.totalorder %s155, %s157
      %p164 = scmp.eq.s32.totalorder %s21, 1
      %p165 = por %p163, %p164
      %p166 = scmp.ne.s32.totalorder %s157, %s158
      %p167 = scmp.eq.s32.totalorder %s21, 0
      %p168 = por %p166, %p167
      %p169 = scmp.ne.s32.totalorder %s157, %s158
      %p170 = scmp.eq.s32.totalorder %s22, 1
      %p171 = por %p169, %p170
      %p173 = scmp.ne.s32.totalorder %s158, %s172
      %p174 = scmp.eq.s32.totalorder %s22, 0
      %p175 = por %p173, %p174
      %s176 = ssub.s32 %s16, %s23
      %p177 = scmp.eq.s32.totalorder %s176, 0
      %s179 = sadd.s32 %s178, 1
      %s180 = scalar_select %p177, %s178, %s179
      %p183 = pneg %p177
      %p184 = scmp.eq.s32.totalorder %s16, 1
      %p185 = por %p183, %p184
      %p186 = scmp.ne.s32.totalorder %s178, %s181
      %p187 = scmp.eq.s32.totalorder %s16, 0
      %p188 = por %p186, %p187
      %p189 = scmp.ne.s32.totalorder %s178, %s181
      %p190 = scmp.eq.s32.totalorder %s21, 1
      %p191 = por %p189, %p190
      %p192 = scmp.ne.s32.totalorder %s181, %s182
      %p193 = scmp.eq.s32.totalorder %s21, 0
      %p194 = por %p192, %p193
      %p195 = scmp.ne.s32.totalorder %s181, %s182
      %p196 = scmp.eq.s32.totalorder %s22, 1
      %p197 = por %p195, %p196
      %p199 = scmp.ne.s32.totalorder %s182, %s198
      %p200 = scmp.eq.s32.totalorder %s22, 0
      %p201 = por %p199, %p200
      %p202 = scmp.le.s32.totalorder 1, %s16
      %p203 = scmp.lt.s32.totalorder %s16, 3
      %p204 = pnand %p202, %p203
      %p205 = pneg %p204
      // Predicated region
      $region9: #{tpu_custom_call.1} parent=5 // pred_check
        _
      $region10: #{tpu_custom_call.1} parent=5 // pred_check_branch
        %207 = sbr.rel (%p204) target = $region12
      $region11: #{tpu_custom_call.1} parent=5 // pred_region
        %s208 = ssub.s32 %s16, 1
        // Predicated region
        $region13: #{tpu_custom_call.1} parent=11 // pred_check
          %p209 = pneg %p63
        $region14: #{tpu_custom_call.1} parent=11 // pred_check_branch
          %211 = sbr.rel (%p209) target = $region16
        $region15: #{tpu_custom_call.1} parent=11 // pred_region
          _
        $region16: #{tpu_custom_call.1} parent=11 // pred_fallthru
          _
        // Predicated region
        $region17: #{tpu_custom_call.1} parent=11 // pred_check
          %p212 = pneg %p84
        $region18: #{tpu_custom_call.1} parent=11 // pred_check_branch
          %214 = sbr.rel (%p212) target = $region20
        $region19: #{tpu_custom_call.1} parent=11 // pred_region
          _
        $region20: #{tpu_custom_call.1} parent=11 // pred_fallthru
          _
        // Predicated region
        $region21: #{tpu_custom_call.1} parent=11 // pred_check
          %p215 = pneg %p105
        $region22: #{tpu_custom_call.1} parent=11 // pred_check_branch
          %217 = sbr.rel (%p215) target = $region24
        $region23: #{tpu_custom_call.1} parent=11 // pred_region
          _
        $region24: #{tpu_custom_call.1} parent=11 // pred_fallthru
          _
        // Predicated region
        $region25: #{tpu_custom_call.1} parent=11 // pred_check
          %p218 = pneg %p126
        $region26: #{tpu_custom_call.1} parent=11 // pred_check_branch
          %220 = sbr.rel (%p218) target = $region28
        $region27: #{tpu_custom_call.1} parent=11 // pred_region
          _
        $region28: #{tpu_custom_call.1} parent=11 // pred_fallthru
          _
        // Predicated region
        $region29: #{tpu_custom_call.1} parent=11 // pred_check
          %p221 = pneg %p147
        $region30: #{tpu_custom_call.1} parent=11 // pred_check_branch
          %223 = sbr.rel (%p221) target = $region32
        $region31: #{tpu_custom_call.1} parent=11 // pred_region
          _
        $region32: #{tpu_custom_call.1} parent=11 // pred_fallthru
          _
        // Predicated region
        $region33: #{tpu_custom_call.1} parent=11 // pred_check
          %p224 = pneg %p168
        $region34: #{tpu_custom_call.1} parent=11 // pred_check_branch
          %226 = sbr.rel (%p224) target = $region36
        $region35: #{tpu_custom_call.1} parent=11 // pred_region
          _
        $region36: #{tpu_custom_call.1} parent=11 // pred_fallthru
          _
      $region12: #{tpu_custom_call.1} parent=5 // pred_fallthru
        _
      %p227 = scmp.lt.s32.totalorder %s16, 2
      // Predicated region
      $region37: #{tpu_custom_call.1} parent=5 // pred_check
        %p228 = pneg %p227
      $region38: #{tpu_custom_call.1} parent=5 // pred_check_branch
        %230 = sbr.rel (%p228) target = $region40
      $region39: #{tpu_custom_call.1} parent=5 // pred_region
        // Predicated region
        $region41: #{tpu_custom_call.1} parent=39 // pred_check
          %p231 = pneg %p36
        $region42: #{tpu_custom_call.1} parent=39 // pred_check_branch
          %233 = sbr.rel (%p231) target = $region44
        $region43: #{tpu_custom_call.1} parent=39 // pred_region
          %p234 = scmp.lt.s32.totalorder %s16, 1
          %s235 = scalar_select %p234, %s16, 1
          %s236 = smul.addr %s235, 32
          %s237 = smul.addr %s236, 8
          %s238 = scalar_lea.vmem %s0, %s237
        $region44: #{tpu_custom_call.1} parent=39 // pred_fallthru
          _
      $region40: #{tpu_custom_call.1} parent=5 // pred_fallthru
        _
      %p239 = scmp.le.s32.totalorder 1, %s16
      %p240 = scmp.lt.s32.totalorder %s16, 3
      %p241 = pnand %p239, %p240
      %p242 = pneg %p241
      // Predicated region
      $region45: #{tpu_custom_call.1} parent=5 // pred_check
        _
      $region46: #{tpu_custom_call.1} parent=5 // pred_check_branch
        %244 = sbr.rel (%p241) target = $region48
      $region47: #{tpu_custom_call.1} parent=5 // pred_region
        %s245 = ssub.s32 %s16, 1
        %p246 = scmp.lt.s32.totalorder %s21, 1
        %s247 = scalar_select %p246, %s21, 1
        %s248 = smul.addr %s247, 32
        %s249 = smul.addr %s248, 8
        %s250 = scalar_lea.vmem %s0, %s249
        %p251 = pneg %p42
        %p252 = pneg %p39
        %p253 = pneg %p63
        %p254 = pneg %p60
        %p255 = pneg %p84
        %p256 = pneg %p81
        %p257 = pneg %p105
        %p258 = pneg %p102
        %p259 = pneg %p126
        %p260 = pneg %p123
        %p261 = pneg %p147
        %p262 = pneg %p144
        %p263 = pneg %p168
        %p264 = pneg %p165
        %p265 = pneg %p194
        %p266 = pneg %p191
        %s267 = sand.u32 %s181, 1
        %s268 = scalar_lea.sflag [#allocation5], %s267
        %s269 = sand.u32 %s181, 1
        %s270 = smul.addr %s269, 8
        %s271 = scalar_lea.vmem [#allocation4], %s270
        %p272 = scmp.lt.s32.totalorder %s21, 1
        %s273 = scalar_select %p272, %s21, 1
        %s274 = smul.addr %s273, 32
        %s275 = smul.addr %s274, 8
        %s276 = scalar_lea.vmem %s0, %s275
        %vm277 = vcmask 31744
        %278 = vst.msk [vmem:[#allocation2] sm:$0xff] %vm277, 0.0
        %vm279 = vcmask 25600
        %280 = vst.msk [vmem:[#allocation2 + $0x8] sm:$0x3] %vm279, 0.0
        %281 = vst.msk [vmem:[#allocation2 + $0x10] sm:$0xff] %vm277, 0.0
        %282 = vst.msk [vmem:[#allocation2 + $0x18] sm:$0x3] %vm279, 0.0
        %283 = vst.msk [vmem:[#allocation2 + $0x20] sm:$0xff] %vm277, 0.0
        %284 = vst.msk [vmem:[#allocation2 + $0x28] sm:$0x3] %vm279, 0.0
        %285 = vst.msk [vmem:[#allocation2 + $0x30] sm:$0xff] %vm277, 0.0
        %286 = vst.msk [vmem:[#allocation2 + $0x38] sm:$0x3] %vm279, 0.0
        %287 = vst.msk [vmem:[#allocation2 + $0x40] sm:$0xff] %vm277, 0.0
        %288 = vst.msk [vmem:[#allocation2 + $0x48] sm:$0x3] %vm279, 0.0
        %289 = vst.msk [vmem:[#allocation2 + $0x50] sm:$0xff] %vm277, 0.0
        %290 = vst.msk [vmem:[#allocation2 + $0x58] sm:$0x3] %vm279, 0.0
        %291 = vst.msk [vmem:[#allocation2 + $0x60] sm:$0xff] %vm277, 0.0
        %292 = vst.msk [vmem:[#allocation2 + $0x68] sm:$0x3] %vm279, 0.0
        %293 = vst.msk [vmem:[#allocation2 + $0x70] sm:$0xff] %vm277, 0.0
        %294 = vst.msk [vmem:[#allocation2 + $0x78] sm:$0x3] %vm279, 0.0
        %295 = vst.msk [vmem:[#allocation2 + $0x80] sm:$0xff] %vm277, 0.0
        %296 = vst.msk [vmem:[#allocation2 + $0x88] sm:$0x3] %vm279, 0.0
        %297 = vst.msk [vmem:[#allocation2 + $0x90] sm:$0xff] %vm277, 0.0
        %298 = vst.msk [vmem:[#allocation2 + $0x98] sm:$0x3] %vm279, 0.0
        %vm299 = vcmask 64512
        %300 = vst.msk [vmem:[#allocation3] sm:$0xff] %vm299, 0.0
        %vm301 = vcmask 58368
        %302 = vst.msk [vmem:[#allocation3 + $0x8] sm:$0x3] %vm301, 0.0
        %303 = vst.msk [vmem:[#allocation3 + $0x10] sm:$0xff] %vm299, 0.0
        %304 = vst.msk [vmem:[#allocation3 + $0x18] sm:$0x3] %vm301, 0.0
        %305 = vst.msk [vmem:[#allocation3 + $0x20] sm:$0xff] %vm299, 0.0
        %306 = vst.msk [vmem:[#allocation3 + $0x28] sm:$0x3] %vm301, 0.0
        %307 = vst.msk [vmem:[#allocation3 + $0x30] sm:$0xff] %vm299, 0.0
        %308 = vst.msk [vmem:[#allocation3 + $0x38] sm:$0x3] %vm301, 0.0
        %309 = vst.msk [vmem:[#allocation3 + $0x40] sm:$0xff] %vm299, 0.0
        %310 = vst.msk [vmem:[#allocation3 + $0x48] sm:$0x3] %vm301, 0.0
        %311 = vst.msk [vmem:[#allocation3 + $0x50] sm:$0xff] %vm299, 0.0
        %312 = vst.msk [vmem:[#allocation3 + $0x58] sm:$0x3] %vm301, 0.0
        %313 = vst.msk [vmem:[#allocation3 + $0x60] sm:$0xff] %vm299, 0.0
        %314 = vst.msk [vmem:[#allocation3 + $0x68] sm:$0x3] %vm301, 0.0
        %315 = vst.msk [vmem:[#allocation3 + $0x70] sm:$0xff] %vm299, 0.0
        %316 = vst.msk [vmem:[#allocation3 + $0x78] sm:$0x3] %vm301, 0.0
        %317 = vst.msk [vmem:[#allocation3 + $0x80] sm:$0xff] %vm299, 0.0
        %318 = vst.msk [vmem:[#allocation3 + $0x88] sm:$0x3] %vm301, 0.0
        %319 = vst.msk [vmem:[#allocation3 + $0x90] sm:$0xff] %vm299, 0.0
        %320 = vst.msk [vmem:[#allocation3 + $0x98] sm:$0x3] %vm301, 0.0
        %v321 = vld [vmem:[%s276] sm:$0xff]
        %v322 = vld [vmem:[%s276 + $0x8] sm:$0xff]
        %v323 = vld [vmem:[%s276 + $0x10] sm:$0xff]
        %v324 = vld [vmem:[%s276 + $0x18] sm:$0xff]
        %v325 = vld [vmem:[%s276 + $0x20] sm:$0xff]
        %v326 = vld [vmem:[%s276 + $0x28] sm:$0xff]
        %v327 = vld [vmem:[%s276 + $0x30] sm:$0xff]
        %v328 = vld [vmem:[%s276 + $0x38] sm:$0xff]
        %v329 = vld [vmem:[%s276 + $0x40] sm:$0xff]
        %v330 = vld [vmem:[%s276 + $0x48] sm:$0xff]
        %v331 = vld [vmem:[%s276 + $0x50] sm:$0xff]
        %v332 = vld [vmem:[%s276 + $0x58] sm:$0xff]
        %v333 = vld [vmem:[%s276 + $0x60] sm:$0xff]
        %v334 = vld [vmem:[%s276 + $0x68] sm:$0xff]
        %v335 = vld [vmem:[%s276 + $0x70] sm:$0xff]
        %v336 = vld [vmem:[%s276 + $0x78] sm:$0xff]
        %v337 = vld [vmem:[%s276 + $0x80] sm:$0xff]
        %v338 = vld [vmem:[%s276 + $0x88] sm:$0xff]
        %v339 = vld [vmem:[%s276 + $0x90] sm:$0xff]
        %v340 = vld [vmem:[%s276 + $0x98] sm:$0xff]
        %v341 = vld [vmem:[%s276 + $0xa0] sm:$0xff]
        %v342 = vld [vmem:[%s276 + $0xa8] sm:$0xff]
        %v343 = vld [vmem:[%s276 + $0xb0] sm:$0xff]
        %v344 = vld [vmem:[%s276 + $0xb8] sm:$0xff]
        %v345 = vld [vmem:[%s276 + $0xc0] sm:$0xff]
        %v346 = vld [vmem:[%s276 + $0xc8] sm:$0xff]
        %v347 = vld [vmem:[%s276 + $0xd0] sm:$0xff]
        %v348 = vld [vmem:[%s276 + $0xd8] sm:$0xff]
        %v349 = vld [vmem:[%s276 + $0xe0] sm:$0xff]
        %v350 = vld [vmem:[%s276 + $0xe8] sm:$0xff]
        %v351 = vld [vmem:[%s276 + $0xf0] sm:$0xff]
        %v352 = vld [vmem:[%s276 + $0xf8] sm:$0xff]
        %v385 = vcombine.high %v321, %v321
        %v387 = vunpack.c.l.s4 1983009808
        %v388 = vunpack.c.0.s8 %v387
        %v389 = vlaneseq
        %v390 = vshrl.u32 %v389, 7
        %v391 = vsub.s32 %v388, %v390
        %v392 = vrot.slane %v321, %v391
        %v394 = vunpack.c.l.s4 1983009808
        %v395 = vunpack.c.0.s8 %v394
        %v396 = vlaneseq
        %v397 = vshrl.u32 %v396, 7
        %v398 = vsub.s32 %v395, %v397
        %v399 = vrot.slane %v385, %v398
        %v400 = vcombine.high %v392, %v392
        %v401 = vcombine.high %v399, %v399
        %v402 = vcombine.high %v322, %v322
        %v404 = vunpack.c.l.s4 1983009808
        %v405 = vunpack.c.0.s8 %v404
        %v406 = vlaneseq
        %v407 = vshrl.u32 %v406, 7
        %v408 = vsub.s32 %v405, %v407
        %v409 = vrot.slane %v322, %v408
        %v411 = vunpack.c.l.s4 1983009808
        %v412 = vunpack.c.0.s8 %v411
        %v413 = vlaneseq
        %v414 = vshrl.u32 %v413, 7
        %v415 = vsub.s32 %v412, %v414
        %v416 = vrot.slane %v402, %v415
        %v417 = vcombine.high %v409, %v409
        %v418 = vcombine.high %v416, %v416
        %v419 = vcombine.high %v323, %v323
        %v421 = vunpack.c.l.s4 1983009808
        %v422 = vunpack.c.0.s8 %v421
        %v423 = vlaneseq
        %v424 = vshrl.u32 %v423, 7
        %v425 = vsub.s32 %v422, %v424
        %v426 = vrot.slane %v323, %v425
        %v428 = vunpack.c.l.s4 1983009808
        %v429 = vunpack.c.0.s8 %v428
        %v430 = vlaneseq
        %v431 = vshrl.u32 %v430, 7
        %v432 = vsub.s32 %v429, %v431
        %v433 = vrot.slane %v419, %v432
        %v434 = vcombine.high %v426, %v426
        %v435 = vcombine.high %v433, %v433
        %v436 = vcombine.high %v324, %v324
        %v438 = vunpack.c.l.s4 1983009808
        %v439 = vunpack.c.0.s8 %v438
        %v440 = vlaneseq
        %v441 = vshrl.u32 %v440, 7
        %v442 = vsub.s32 %v439, %v441
        %v443 = vrot.slane %v324, %v442
        %v445 = vunpack.c.l.s4 1983009808
        %v446 = vunpack.c.0.s8 %v445
        %v447 = vlaneseq
        %v448 = vshrl.u32 %v447, 7
        %v449 = vsub.s32 %v446, %v448
        %v450 = vrot.slane %v436, %v449
        %v451 = vcombine.high %v443, %v443
        %v452 = vcombine.high %v450, %v450
        %v453 = vcombine.high %v325, %v325
        %v455 = vunpack.c.l.s4 1983009808
        %v456 = vunpack.c.0.s8 %v455
        %v457 = vlaneseq
        %v458 = vshrl.u32 %v457, 7
        %v459 = vsub.s32 %v456, %v458
        %v460 = vrot.slane %v325, %v459
        %v462 = vunpack.c.l.s4 1983009808
        %v463 = vunpack.c.0.s8 %v462
        %v464 = vlaneseq
        %v465 = vshrl.u32 %v464, 7
        %v466 = vsub.s32 %v463, %v465
        %v467 = vrot.slane %v453, %v466
        %v468 = vcombine.high %v460, %v460
        %v469 = vcombine.high %v467, %v467
        %v470 = vcombine.high %v326, %v326
        %v472 = vunpack.c.l.s4 1983009808
        %v473 = vunpack.c.0.s8 %v472
        %v474 = vlaneseq
        %v475 = vshrl.u32 %v474, 7
        %v476 = vsub.s32 %v473, %v475
        %v477 = vrot.slane %v326, %v476
        %v479 = vunpack.c.l.s4 1983009808
        %v480 = vunpack.c.0.s8 %v479
        %v481 = vlaneseq
        %v482 = vshrl.u32 %v481, 7
        %v483 = vsub.s32 %v480, %v482
        %v484 = vrot.slane %v470, %v483
        %v485 = vcombine.high %v477, %v477
        %v486 = vcombine.high %v484, %v484
        %v487 = vcombine.high %v327, %v327
        %v489 = vunpack.c.l.s4 1983009808
        %v490 = vunpack.c.0.s8 %v489
        %v491 = vlaneseq
        %v492 = vshrl.u32 %v491, 7
        %v493 = vsub.s32 %v490, %v492
        %v494 = vrot.slane %v327, %v493
        %v496 = vunpack.c.l.s4 1983009808
        %v497 = vunpack.c.0.s8 %v496
        %v498 = vlaneseq
        %v499 = vshrl.u32 %v498, 7
        %v500 = vsub.s32 %v497, %v499
        %v501 = vrot.slane %v487, %v500
        %v502 = vcombine.high %v494, %v494
        %v503 = vcombine.high %v501, %v501
        %v504 = vcombine.high %v328, %v328
        %v506 = vunpack.c.l.s4 1983009808
        %v507 = vunpack.c.0.s8 %v506
        %v508 = vlaneseq
        %v509 = vshrl.u32 %v508, 7
        %v510 = vsub.s32 %v507, %v509
        %v511 = vrot.slane %v328, %v510
        %v513 = vunpack.c.l.s4 1983009808
        %v514 = vunpack.c.0.s8 %v513
        %v515 = vlaneseq
        %v516 = vshrl.u32 %v515, 7
        %v517 = vsub.s32 %v514, %v516
        %v518 = vrot.slane %v504, %v517
        %v519 = vcombine.high %v511, %v511
        %v520 = vcombine.high %v518, %v518
        %v521 = vcombine.high %v329, %v329
        %v523 = vunpack.c.l.s4 1983009808
        %v524 = vunpack.c.0.s8 %v523
        %v525 = vlaneseq
        %v526 = vshrl.u32 %v525, 7
        %v527 = vsub.s32 %v524, %v526
        %v528 = vrot.slane %v329, %v527
        %v530 = vunpack.c.l.s4 1983009808
        %v531 = vunpack.c.0.s8 %v530
        %v532 = vlaneseq
        %v533 = vshrl.u32 %v532, 7
        %v534 = vsub.s32 %v531, %v533
        %v535 = vrot.slane %v521, %v534
        %v536 = vcombine.high %v528, %v528
        %v537 = vcombine.high %v535, %v535
        %v538 = vcombine.high %v330, %v330
        %v540 = vunpack.c.l.s4 1983009808
        %v541 = vunpack.c.0.s8 %v540
        %v542 = vlaneseq
        %v543 = vshrl.u32 %v542, 7
        %v544 = vsub.s32 %v541, %v543
        %v545 = vrot.slane %v330, %v544
        %v547 = vunpack.c.l.s4 1983009808
        %v548 = vunpack.c.0.s8 %v547
        %v549 = vlaneseq
        %v550 = vshrl.u32 %v549, 7
        %v551 = vsub.s32 %v548, %v550
        %v552 = vrot.slane %v538, %v551
        %v553 = vcombine.high %v545, %v545
        %v554 = vcombine.high %v552, %v552
        %v555 = vcombine.high %v331, %v331
        %v557 = vunpack.c.l.s4 1983009808
        %v558 = vunpack.c.0.s8 %v557
        %v559 = vlaneseq
        %v560 = vshrl.u32 %v559, 7
        %v561 = vsub.s32 %v558, %v560
        %v562 = vrot.slane %v331, %v561
        %v564 = vunpack.c.l.s4 1983009808
        %v565 = vunpack.c.0.s8 %v564
        %v566 = vlaneseq
        %v567 = vshrl.u32 %v566, 7
        %v568 = vsub.s32 %v565, %v567
        %v569 = vrot.slane %v555, %v568
        %v570 = vcombine.high %v562, %v562
        %v571 = vcombine.high %v569, %v569
        %v572 = vcombine.high %v332, %v332
        %v574 = vunpack.c.l.s4 1983009808
        %v575 = vunpack.c.0.s8 %v574
        %v576 = vlaneseq
        %v577 = vshrl.u32 %v576, 7
        %v578 = vsub.s32 %v575, %v577
        %v579 = vrot.slane %v332, %v578
        %v581 = vunpack.c.l.s4 1983009808
        %v582 = vunpack.c.0.s8 %v581
        %v583 = vlaneseq
        %v584 = vshrl.u32 %v583, 7
        %v585 = vsub.s32 %v582, %v584
        %v586 = vrot.slane %v572, %v585
        %v587 = vcombine.high %v579, %v579
        %v588 = vcombine.high %v586, %v586
        %v589 = vcombine.high %v333, %v333
        %v591 = vunpack.c.l.s4 1983009808
        %v592 = vunpack.c.0.s8 %v591
        %v593 = vlaneseq
        %v594 = vshrl.u32 %v593, 7
        %v595 = vsub.s32 %v592, %v594
        %v596 = vrot.slane %v333, %v595
        %v598 = vunpack.c.l.s4 1983009808
        %v599 = vunpack.c.0.s8 %v598
        %v600 = vlaneseq
        %v601 = vshrl.u32 %v600, 7
        %v602 = vsub.s32 %v599, %v601
        %v603 = vrot.slane %v589, %v602
        %v604 = vcombine.high %v596, %v596
        %v605 = vcombine.high %v603, %v603
        %v606 = vcombine.high %v334, %v334
        %v608 = vunpack.c.l.s4 1983009808
        %v609 = vunpack.c.0.s8 %v608
        %v610 = vlaneseq
        %v611 = vshrl.u32 %v610, 7
        %v612 = vsub.s32 %v609, %v611
        %v613 = vrot.slane %v334, %v612
        %v615 = vunpack.c.l.s4 1983009808
        %v616 = vunpack.c.0.s8 %v615
        %v617 = vlaneseq
        %v618 = vshrl.u32 %v617, 7
        %v619 = vsub.s32 %v616, %v618
        %v620 = vrot.slane %v606, %v619
        %v621 = vcombine.high %v613, %v613
        %v622 = vcombine.high %v620, %v620
        %v623 = vcombine.high %v335, %v335
        %v625 = vunpack.c.l.s4 1983009808
        %v626 = vunpack.c.0.s8 %v625
        %v627 = vlaneseq
        %v628 = vshrl.u32 %v627, 7
        %v629 = vsub.s32 %v626, %v628
        %v630 = vrot.slane %v335, %v629
        %v632 = vunpack.c.l.s4 1983009808
        %v633 = vunpack.c.0.s8 %v632
        %v634 = vlaneseq
        %v635 = vshrl.u32 %v634, 7
        %v636 = vsub.s32 %v633, %v635
        %v637 = vrot.slane %v623, %v636
        %v638 = vcombine.high %v630, %v630
        %v639 = vcombine.high %v637, %v637
        %v640 = vcombine.high %v336, %v336
        %v642 = vunpack.c.l.s4 1983009808
        %v643 = vunpack.c.0.s8 %v642
        %v644 = vlaneseq
        %v645 = vshrl.u32 %v644, 7
        %v646 = vsub.s32 %v643, %v645
        %v647 = vrot.slane %v336, %v646
        %v649 = vunpack.c.l.s4 1983009808
        %v650 = vunpack.c.0.s8 %v649
        %v651 = vlaneseq
        %v652 = vshrl.u32 %v651, 7
        %v653 = vsub.s32 %v650, %v652
        %v654 = vrot.slane %v640, %v653
        %v655 = vcombine.high %v647, %v647
        %v656 = vcombine.high %v654, %v654
        %v657 = vcombine.high %v337, %v337
        %v659 = vunpack.c.l.s4 1983009808
        %v660 = vunpack.c.0.s8 %v659
        %v661 = vlaneseq
        %v662 = vshrl.u32 %v661, 7
        %v663 = vsub.s32 %v660, %v662
        %v664 = vrot.slane %v337, %v663
        %v666 = vunpack.c.l.s4 1983009808
        %v667 = vunpack.c.0.s8 %v666
        %v668 = vlaneseq
        %v669 = vshrl.u32 %v668, 7
        %v670 = vsub.s32 %v667, %v669
        %v671 = vrot.slane %v657, %v670
        %v672 = vcombine.high %v664, %v664
        %v673 = vcombine.high %v671, %v671
        %v674 = vcombine.high %v338, %v338
        %v676 = vunpack.c.l.s4 1983009808
        %v677 = vunpack.c.0.s8 %v676
        %v678 = vlaneseq
        %v679 = vshrl.u32 %v678, 7
        %v680 = vsub.s32 %v677, %v679
        %v681 = vrot.slane %v338, %v680
        %v683 = vunpack.c.l.s4 1983009808
        %v684 = vunpack.c.0.s8 %v683
        %v685 = vlaneseq
        %v686 = vshrl.u32 %v685, 7
        %v687 = vsub.s32 %v684, %v686
        %v688 = vrot.slane %v674, %v687
        %v689 = vcombine.high %v681, %v681
        %v690 = vcombine.high %v688, %v688
        %v691 = vcombine.high %v339, %v339
        %v693 = vunpack.c.l.s4 1983009808
        %v694 = vunpack.c.0.s8 %v693
        %v695 = vlaneseq
        %v696 = vshrl.u32 %v695, 7
        %v697 = vsub.s32 %v694, %v696
        %v698 = vrot.slane %v339, %v697
        %v700 = vunpack.c.l.s4 1983009808
        %v701 = vunpack.c.0.s8 %v700
        %v702 = vlaneseq
        %v703 = vshrl.u32 %v702, 7
        %v704 = vsub.s32 %v701, %v703
        %v705 = vrot.slane %v691, %v704
        %v706 = vcombine.high %v698, %v698
        %v707 = vcombine.high %v705, %v705
        %v708 = vcombine.high %v340, %v340
        %v710 = vunpack.c.l.s4 1983009808
        %v711 = vunpack.c.0.s8 %v710
        %v712 = vlaneseq
        %v713 = vshrl.u32 %v712, 7
        %v714 = vsub.s32 %v711, %v713
        %v715 = vrot.slane %v340, %v714
        %v717 = vunpack.c.l.s4 1983009808
        %v718 = vunpack.c.0.s8 %v717
        %v719 = vlaneseq
        %v720 = vshrl.u32 %v719, 7
        %v721 = vsub.s32 %v718, %v720
        %v722 = vrot.slane %v708, %v721
        %v723 = vcombine.high %v715, %v715
        %v724 = vcombine.high %v722, %v722
        %v725 = vcombine.high %v341, %v341
        %v727 = vunpack.c.l.s4 1983009808
        %v728 = vunpack.c.0.s8 %v727
        %v729 = vlaneseq
        %v730 = vshrl.u32 %v729, 7
        %v731 = vsub.s32 %v728, %v730
        %v732 = vrot.slane %v341, %v731
        %v734 = vunpack.c.l.s4 1983009808
        %v735 = vunpack.c.0.s8 %v734
        %v736 = vlaneseq
        %v737 = vshrl.u32 %v736, 7
        %v738 = vsub.s32 %v735, %v737
        %v739 = vrot.slane %v725, %v738
        %v740 = vcombine.high %v732, %v732
        %v741 = vcombine.high %v739, %v739
        %v742 = vcombine.high %v342, %v342
        %v744 = vunpack.c.l.s4 1983009808
        %v745 = vunpack.c.0.s8 %v744
        %v746 = vlaneseq
        %v747 = vshrl.u32 %v746, 7
        %v748 = vsub.s32 %v745, %v747
        %v749 = vrot.slane %v342, %v748
        %v751 = vunpack.c.l.s4 1983009808
        %v752 = vunpack.c.0.s8 %v751
        %v753 = vlaneseq
        %v754 = vshrl.u32 %v753, 7
        %v755 = vsub.s32 %v752, %v754
        %v756 = vrot.slane %v742, %v755
        %v757 = vcombine.high %v749, %v749
        %v758 = vcombine.high %v756, %v756
        %v759 = vcombine.high %v343, %v343
        %v761 = vunpack.c.l.s4 1983009808
        %v762 = vunpack.c.0.s8 %v761
        %v763 = vlaneseq
        %v764 = vshrl.u32 %v763, 7
        %v765 = vsub.s32 %v762, %v764
        %v766 = vrot.slane %v343, %v765
        %v768 = vunpack.c.l.s4 1983009808
        %v769 = vunpack.c.0.s8 %v768
        %v770 = vlaneseq
        %v771 = vshrl.u32 %v770, 7
        %v772 = vsub.s32 %v769, %v771
        %v773 = vrot.slane %v759, %v772
        %v774 = vcombine.high %v766, %v766
        %v775 = vcombine.high %v773, %v773
        %v776 = vcombine.high %v344, %v344
        %v778 = vunpack.c.l.s4 1983009808
        %v779 = vunpack.c.0.s8 %v778
        %v780 = vlaneseq
        %v781 = vshrl.u32 %v780, 7
        %v782 = vsub.s32 %v779, %v781
        %v783 = vrot.slane %v344, %v782
        %v785 = vunpack.c.l.s4 1983009808
        %v786 = vunpack.c.0.s8 %v785
        %v787 = vlaneseq
        %v788 = vshrl.u32 %v787, 7
        %v789 = vsub.s32 %v786, %v788
        %v790 = vrot.slane %v776, %v789
        %v791 = vcombine.high %v783, %v783
        %v792 = vcombine.high %v790, %v790
        %v793 = vcombine.high %v345, %v345
        %v795 = vunpack.c.l.s4 1983009808
        %v796 = vunpack.c.0.s8 %v795
        %v797 = vlaneseq
        %v798 = vshrl.u32 %v797, 7
        %v799 = vsub.s32 %v796, %v798
        %v800 = vrot.slane %v345, %v799
        %v802 = vunpack.c.l.s4 1983009808
        %v803 = vunpack.c.0.s8 %v802
        %v804 = vlaneseq
        %v805 = vshrl.u32 %v804, 7
        %v806 = vsub.s32 %v803, %v805
        %v807 = vrot.slane %v793, %v806
        %v808 = vcombine.high %v800, %v800
        %v809 = vcombine.high %v807, %v807
        %v810 = vcombine.high %v346, %v346
        %v812 = vunpack.c.l.s4 1983009808
        %v813 = vunpack.c.0.s8 %v812
        %v814 = vlaneseq
        %v815 = vshrl.u32 %v814, 7
        %v816 = vsub.s32 %v813, %v815
        %v817 = vrot.slane %v346, %v816
        %v819 = vunpack.c.l.s4 1983009808
        %v820 = vunpack.c.0.s8 %v819
        %v821 = vlaneseq
        %v822 = vshrl.u32 %v821, 7
        %v823 = vsub.s32 %v820, %v822
        %v824 = vrot.slane %v810, %v823
        %v825 = vcombine.high %v817, %v817
        %v826 = vcombine.high %v824, %v824
        %v827 = vcombine.high %v347, %v347
        %v829 = vunpack.c.l.s4 1983009808
        %v830 = vunpack.c.0.s8 %v829
        %v831 = vlaneseq
        %v832 = vshrl.u32 %v831, 7
        %v833 = vsub.s32 %v830, %v832
        %v834 = vrot.slane %v347, %v833
        %v836 = vunpack.c.l.s4 1983009808
        %v837 = vunpack.c.0.s8 %v836
        %v838 = vlaneseq
        %v839 = vshrl.u32 %v838, 7
        %v840 = vsub.s32 %v837, %v839
        %v841 = vrot.slane %v827, %v840
        %v842 = vcombine.high %v834, %v834
        %v843 = vcombine.high %v841, %v841
        %v844 = vcombine.high %v348, %v348
        %v846 = vunpack.c.l.s4 1983009808
        %v847 = vunpack.c.0.s8 %v846
        %v848 = vlaneseq
        %v849 = vshrl.u32 %v848, 7
        %v850 = vsub.s32 %v847, %v849
        %v851 = vrot.slane %v348, %v850
        %v853 = vunpack.c.l.s4 1983009808
        %v854 = vunpack.c.0.s8 %v853
        %v855 = vlaneseq
        %v856 = vshrl.u32 %v855, 7
        %v857 = vsub.s32 %v854, %v856
        %v858 = vrot.slane %v844, %v857
        %v859 = vcombine.high %v851, %v851
        %v860 = vcombine.high %v858, %v858
        %v861 = vcombine.high %v349, %v349
        %v863 = vunpack.c.l.s4 1983009808
        %v864 = vunpack.c.0.s8 %v863
        %v865 = vlaneseq
        %v866 = vshrl.u32 %v865, 7
        %v867 = vsub.s32 %v864, %v866
        %v868 = vrot.slane %v349, %v867
        %v870 = vunpack.c.l.s4 1983009808
        %v871 = vunpack.c.0.s8 %v870
        %v872 = vlaneseq
        %v873 = vshrl.u32 %v872, 7
        %v874 = vsub.s32 %v871, %v873
        %v875 = vrot.slane %v861, %v874
        %v876 = vcombine.high %v868, %v868
        %v877 = vcombine.high %v875, %v875
        %v878 = vcombine.high %v350, %v350
        %v880 = vunpack.c.l.s4 1983009808
        %v881 = vunpack.c.0.s8 %v880
        %v882 = vlaneseq
        %v883 = vshrl.u32 %v882, 7
        %v884 = vsub.s32 %v881, %v883
        %v885 = vrot.slane %v350, %v884
        %v887 = vunpack.c.l.s4 1983009808
        %v888 = vunpack.c.0.s8 %v887
        %v889 = vlaneseq
        %v890 = vshrl.u32 %v889, 7
        %v891 = vsub.s32 %v888, %v890
        %v892 = vrot.slane %v878, %v891
        %v893 = vcombine.high %v885, %v885
        %v894 = vcombine.high %v892, %v892
        %v895 = vcombine.high %v351, %v351
        %v897 = vunpack.c.l.s4 1983009808
        %v898 = vunpack.c.0.s8 %v897
        %v899 = vlaneseq
        %v900 = vshrl.u32 %v899, 7
        %v901 = vsub.s32 %v898, %v900
        %v902 = vrot.slane %v351, %v901
        %v904 = vunpack.c.l.s4 1983009808
        %v905 = vunpack.c.0.s8 %v904
        %v906 = vlaneseq
        %v907 = vshrl.u32 %v906, 7
        %v908 = vsub.s32 %v905, %v907
        %v909 = vrot.slane %v895, %v908
        %v910 = vcombine.high %v902, %v902
        %v911 = vcombine.high %v909, %v909
        %v912 = vcombine.high %v352, %v352
        %v914 = vunpack.c.l.s4 1983009808
        %v915 = vunpack.c.0.s8 %v914
        %v916 = vlaneseq
        %v917 = vshrl.u32 %v916, 7
        %v918 = vsub.s32 %v915, %v917
        %v919 = vrot.slane %v352, %v918
        %v921 = vunpack.c.l.s4 1983009808
        %v922 = vunpack.c.0.s8 %v921
        %v923 = vlaneseq
        %v924 = vshrl.u32 %v923, 7
        %v925 = vsub.s32 %v922, %v924
        %v926 = vrot.slane %v912, %v925
        %v927 = vcombine.high %v919, %v919
        %v928 = vcombine.high %v926, %v926
        %v1057 = vsel %vm279, %v392, -inf
        %v1058 = vrot.slane %v1057, 4
        %v1059 = vmax.f32 %v1057, %v1058
        %v1060 = vrot.slane %v1059, 2
        %v1061 = vmax.f32 %v1059, %v1060
        %v1062 = vrot.slane %v1061, 1
        %v1063 = vmax.f32 %v1061, %v1062
        %v1064 = vsel %vm279, %v400, -inf
        %v1065 = vrot.slane %v1064, 4
        %v1066 = vmax.f32 %v1064, %v1065
        %v1067 = vrot.slane %v1066, 2
        %v1068 = vmax.f32 %v1066, %v1067
        %v1069 = vrot.slane %v1068, 1
        %v1070 = vmax.f32 %v1068, %v1069
        %v1071 = vsel %vm279, %v399, -inf
        %v1072 = vrot.slane %v1071, 4
        %v1073 = vmax.f32 %v1071, %v1072
        %v1074 = vrot.slane %v1073, 2
        %v1075 = vmax.f32 %v1073, %v1074
        %v1076 = vrot.slane %v1075, 1
        %v1077 = vmax.f32 %v1075, %v1076
        %v1078 = vsel %vm279, %v401, -inf
        %v1079 = vrot.slane %v1078, 4
        %v1080 = vmax.f32 %v1078, %v1079
        %v1081 = vrot.slane %v1080, 2
        %v1082 = vmax.f32 %v1080, %v1081
        %v1083 = vrot.slane %v1082, 1
        %v1084 = vmax.f32 %v1082, %v1083
        %v1085 = vsel %vm279, %v409, -inf
        %v1086 = vrot.slane %v1085, 4
        %v1087 = vmax.f32 %v1085, %v1086
        %v1088 = vrot.slane %v1087, 2
        %v1089 = vmax.f32 %v1087, %v1088
        %v1090 = vrot.slane %v1089, 1
        %v1091 = vmax.f32 %v1089, %v1090
        %v1092 = vsel %vm279, %v417, -inf
        %v1093 = vrot.slane %v1092, 4
        %v1094 = vmax.f32 %v1092, %v1093
        %v1095 = vrot.slane %v1094, 2
        %v1096 = vmax.f32 %v1094, %v1095
        %v1097 = vrot.slane %v1096, 1
        %v1098 = vmax.f32 %v1096, %v1097
        %v1099 = vsel %vm279, %v416, -inf
        %v1100 = vrot.slane %v1099, 4
        %v1101 = vmax.f32 %v1099, %v1100
        %v1102 = vrot.slane %v1101, 2
        %v1103 = vmax.f32 %v1101, %v1102
        %v1104 = vrot.slane %v1103, 1
        %v1105 = vmax.f32 %v1103, %v1104
        %v1106 = vsel %vm279, %v418, -inf
        %v1107 = vrot.slane %v1106, 4
        %v1108 = vmax.f32 %v1106, %v1107
        %v1109 = vrot.slane %v1108, 2
        %v1110 = vmax.f32 %v1108, %v1109
        %v1111 = vrot.slane %v1110, 1
        %v1112 = vmax.f32 %v1110, %v1111
        %v1113 = vsel %vm279, %v426, -inf
        %v1114 = vrot.slane %v1113, 4
        %v1115 = vmax.f32 %v1113, %v1114
        %v1116 = vrot.slane %v1115, 2
        %v1117 = vmax.f32 %v1115, %v1116
        %v1118 = vrot.slane %v1117, 1
        %v1119 = vmax.f32 %v1117, %v1118
        %v1120 = vsel %vm279, %v434, -inf
        %v1121 = vrot.slane %v1120, 4
        %v1122 = vmax.f32 %v1120, %v1121
        %v1123 = vrot.slane %v1122, 2
        %v1124 = vmax.f32 %v1122, %v1123
        %v1125 = vrot.slane %v1124, 1
        %v1126 = vmax.f32 %v1124, %v1125
        %v1127 = vsel %vm279, %v433, -inf
        %v1128 = vrot.slane %v1127, 4
        %v1129 = vmax.f32 %v1127, %v1128
        %v1130 = vrot.slane %v1129, 2
        %v1131 = vmax.f32 %v1129, %v1130
        %v1132 = vrot.slane %v1131, 1
        %v1133 = vmax.f32 %v1131, %v1132
        %v1134 = vsel %vm279, %v435, -inf
        %v1135 = vrot.slane %v1134, 4
        %v1136 = vmax.f32 %v1134, %v1135
        %v1137 = vrot.slane %v1136, 2
        %v1138 = vmax.f32 %v1136, %v1137
        %v1139 = vrot.slane %v1138, 1
        %v1140 = vmax.f32 %v1138, %v1139
        %v1141 = vsel %vm279, %v443, -inf
        %v1142 = vrot.slane %v1141, 4
        %v1143 = vmax.f32 %v1141, %v1142
        %v1144 = vrot.slane %v1143, 2
        %v1145 = vmax.f32 %v1143, %v1144
        %v1146 = vrot.slane %v1145, 1
        %v1147 = vmax.f32 %v1145, %v1146
        %v1148 = vsel %vm279, %v451, -inf
        %v1149 = vrot.slane %v1148, 4
        %v1150 = vmax.f32 %v1148, %v1149
        %v1151 = vrot.slane %v1150, 2
        %v1152 = vmax.f32 %v1150, %v1151
        %v1153 = vrot.slane %v1152, 1
        %v1154 = vmax.f32 %v1152, %v1153
        %v1155 = vsel %vm279, %v450, -inf
        %v1156 = vrot.slane %v1155, 4
        %v1157 = vmax.f32 %v1155, %v1156
        %v1158 = vrot.slane %v1157, 2
        %v1159 = vmax.f32 %v1157, %v1158
        %v1160 = vrot.slane %v1159, 1
        %v1161 = vmax.f32 %v1159, %v1160
        %v1162 = vsel %vm279, %v452, -inf
        %v1163 = vrot.slane %v1162, 4
        %v1164 = vmax.f32 %v1162, %v1163
        %v1165 = vrot.slane %v1164, 2
        %v1166 = vmax.f32 %v1164, %v1165
        %v1167 = vrot.slane %v1166, 1
        %v1168 = vmax.f32 %v1166, %v1167
        %v1169 = vsel %vm279, %v460, -inf
        %v1170 = vrot.slane %v1169, 4
        %v1171 = vmax.f32 %v1169, %v1170
        %v1172 = vrot.slane %v1171, 2
        %v1173 = vmax.f32 %v1171, %v1172
        %v1174 = vrot.slane %v1173, 1
        %v1175 = vmax.f32 %v1173, %v1174
        %v1176 = vsel %vm279, %v468, -inf
        %v1177 = vrot.slane %v1176, 4
        %v1178 = vmax.f32 %v1176, %v1177
        %v1179 = vrot.slane %v1178, 2
        %v1180 = vmax.f32 %v1178, %v1179
        %v1181 = vrot.slane %v1180, 1
        %v1182 = vmax.f32 %v1180, %v1181
        %v1183 = vsel %vm279, %v467, -inf
        %v1184 = vrot.slane %v1183, 4
        %v1185 = vmax.f32 %v1183, %v1184
        %v1186 = vrot.slane %v1185, 2
        %v1187 = vmax.f32 %v1185, %v1186
        %v1188 = vrot.slane %v1187, 1
        %v1189 = vmax.f32 %v1187, %v1188
        %v1190 = vsel %vm279, %v469, -inf
        %v1191 = vrot.slane %v1190, 4
        %v1192 = vmax.f32 %v1190, %v1191
        %v1193 = vrot.slane %v1192, 2
        %v1194 = vmax.f32 %v1192, %v1193
        %v1195 = vrot.slane %v1194, 1
        %v1196 = vmax.f32 %v1194, %v1195
        %v1197 = vsel %vm279, %v477, -inf
        %v1198 = vrot.slane %v1197, 4
        %v1199 = vmax.f32 %v1197, %v1198
        %v1200 = vrot.slane %v1199, 2
        %v1201 = vmax.f32 %v1199, %v1200
        %v1202 = vrot.slane %v1201, 1
        %v1203 = vmax.f32 %v1201, %v1202
        %v1204 = vsel %vm279, %v485, -inf
        %v1205 = vrot.slane %v1204, 4
        %v1206 = vmax.f32 %v1204, %v1205
        %v1207 = vrot.slane %v1206, 2
        %v1208 = vmax.f32 %v1206, %v1207
        %v1209 = vrot.slane %v1208, 1
        %v1210 = vmax.f32 %v1208, %v1209
        %v1211 = vsel %vm279, %v484, -inf
        %v1212 = vrot.slane %v1211, 4
        %v1213 = vmax.f32 %v1211, %v1212
        %v1214 = vrot.slane %v1213, 2
        %v1215 = vmax.f32 %v1213, %v1214
        %v1216 = vrot.slane %v1215, 1
        %v1217 = vmax.f32 %v1215, %v1216
        %v1218 = vsel %vm279, %v486, -inf
        %v1219 = vrot.slane %v1218, 4
        %v1220 = vmax.f32 %v1218, %v1219
        %v1221 = vrot.slane %v1220, 2
        %v1222 = vmax.f32 %v1220, %v1221
        %v1223 = vrot.slane %v1222, 1
        %v1224 = vmax.f32 %v1222, %v1223
        %v1225 = vsel %vm279, %v494, -inf
        %v1226 = vrot.slane %v1225, 4
        %v1227 = vmax.f32 %v1225, %v1226
        %v1228 = vrot.slane %v1227, 2
        %v1229 = vmax.f32 %v1227, %v1228
        %v1230 = vrot.slane %v1229, 1
        %v1231 = vmax.f32 %v1229, %v1230
        %v1232 = vsel %vm279, %v502, -inf
        %v1233 = vrot.slane %v1232, 4
        %v1234 = vmax.f32 %v1232, %v1233
        %v1235 = vrot.slane %v1234, 2
        %v1236 = vmax.f32 %v1234, %v1235
        %v1237 = vrot.slane %v1236, 1
        %v1238 = vmax.f32 %v1236, %v1237
        %v1239 = vsel %vm279, %v501, -inf
        %v1240 = vrot.slane %v1239, 4
        %v1241 = vmax.f32 %v1239, %v1240
        %v1242 = vrot.slane %v1241, 2
        %v1243 = vmax.f32 %v1241, %v1242
        %v1244 = vrot.slane %v1243, 1
        %v1245 = vmax.f32 %v1243, %v1244
        %v1246 = vsel %vm279, %v503, -inf
        %v1247 = vrot.slane %v1246, 4
        %v1248 = vmax.f32 %v1246, %v1247
        %v1249 = vrot.slane %v1248, 2
        %v1250 = vmax.f32 %v1248, %v1249
        %v1251 = vrot.slane %v1250, 1
        %v1252 = vmax.f32 %v1250, %v1251
        %v1253 = vsel %vm279, %v511, -inf
        %v1254 = vrot.slane %v1253, 4
        %v1255 = vmax.f32 %v1253, %v1254
        %v1256 = vrot.slane %v1255, 2
        %v1257 = vmax.f32 %v1255, %v1256
        %v1258 = vrot.slane %v1257, 1
        %v1259 = vmax.f32 %v1257, %v1258
        %v1260 = vsel %vm279, %v519, -inf
        %v1261 = vrot.slane %v1260, 4
        %v1262 = vmax.f32 %v1260, %v1261
        %v1263 = vrot.slane %v1262, 2
        %v1264 = vmax.f32 %v1262, %v1263
        %v1265 = vrot.slane %v1264, 1
        %v1266 = vmax.f32 %v1264, %v1265
        %v1267 = vsel %vm279, %v518, -inf
        %v1268 = vrot.slane %v1267, 4
        %v1269 = vmax.f32 %v1267, %v1268
        %v1270 = vrot.slane %v1269, 2
        %v1271 = vmax.f32 %v1269, %v1270
        %v1272 = vrot.slane %v1271, 1
        %v1273 = vmax.f32 %v1271, %v1272
        %v1274 = vsel %vm279, %v520, -inf
        %v1275 = vrot.slane %v1274, 4
        %v1276 = vmax.f32 %v1274, %v1275
        %v1277 = vrot.slane %v1276, 2
        %v1278 = vmax.f32 %v1276, %v1277
        %v1279 = vrot.slane %v1278, 1
        %v1280 = vmax.f32 %v1278, %v1279
        %v1281 = vsel %vm279, %v528, -inf
        %v1282 = vrot.slane %v1281, 4
        %v1283 = vmax.f32 %v1281, %v1282
        %v1284 = vrot.slane %v1283, 2
        %v1285 = vmax.f32 %v1283, %v1284
        %v1286 = vrot.slane %v1285, 1
        %v1287 = vmax.f32 %v1285, %v1286
        %v1288 = vsel %vm279, %v536, -inf
        %v1289 = vrot.slane %v1288, 4
        %v1290 = vmax.f32 %v1288, %v1289
        %v1291 = vrot.slane %v1290, 2
        %v1292 = vmax.f32 %v1290, %v1291
        %v1293 = vrot.slane %v1292, 1
        %v1294 = vmax.f32 %v1292, %v1293
        %v1295 = vsel %vm279, %v535, -inf
        %v1296 = vrot.slane %v1295, 4
        %v1297 = vmax.f32 %v1295, %v1296
        %v1298 = vrot.slane %v1297, 2
        %v1299 = vmax.f32 %v1297, %v1298
        %v1300 = vrot.slane %v1299, 1
        %v1301 = vmax.f32 %v1299, %v1300
        %v1302 = vsel %vm279, %v537, -inf
        %v1303 = vrot.slane %v1302, 4
        %v1304 = vmax.f32 %v1302, %v1303
        %v1305 = vrot.slane %v1304, 2
        %v1306 = vmax.f32 %v1304, %v1305
        %v1307 = vrot.slane %v1306, 1
        %v1308 = vmax.f32 %v1306, %v1307
        %v1309 = vsel %vm279, %v545, -inf
        %v1310 = vrot.slane %v1309, 4
        %v1311 = vmax.f32 %v1309, %v1310
        %v1312 = vrot.slane %v1311, 2
        %v1313 = vmax.f32 %v1311, %v1312
        %v1314 = vrot.slane %v1313, 1
        %v1315 = vmax.f32 %v1313, %v1314
        %v1316 = vsel %vm279, %v553, -inf
        %v1317 = vrot.slane %v1316, 4
        %v1318 = vmax.f32 %v1316, %v1317
        %v1319 = vrot.slane %v1318, 2
        %v1320 = vmax.f32 %v1318, %v1319
        %v1321 = vrot.slane %v1320, 1
        %v1322 = vmax.f32 %v1320, %v1321
        %v1323 = vsel %vm279, %v552, -inf
        %v1324 = vrot.slane %v1323, 4
        %v1325 = vmax.f32 %v1323, %v1324
        %v1326 = vrot.slane %v1325, 2
        %v1327 = vmax.f32 %v1325, %v1326
        %v1328 = vrot.slane %v1327, 1
        %v1329 = vmax.f32 %v1327, %v1328
        %v1330 = vsel %vm279, %v554, -inf
        %v1331 = vrot.slane %v1330, 4
        %v1332 = vmax.f32 %v1330, %v1331
        %v1333 = vrot.slane %v1332, 2
        %v1334 = vmax.f32 %v1332, %v1333
        %v1335 = vrot.slane %v1334, 1
        %v1336 = vmax.f32 %v1334, %v1335
        %v1337 = vsel %vm279, %v562, -inf
        %v1338 = vrot.slane %v1337, 4
        %v1339 = vmax.f32 %v1337, %v1338
        %v1340 = vrot.slane %v1339, 2
        %v1341 = vmax.f32 %v1339, %v1340
        %v1342 = vrot.slane %v1341, 1
        %v1343 = vmax.f32 %v1341, %v1342
        %v1344 = vsel %vm279, %v570, -inf
        %v1345 = vrot.slane %v1344, 4
        %v1346 = vmax.f32 %v1344, %v1345
        %v1347 = vrot.slane %v1346, 2
        %v1348 = vmax.f32 %v1346, %v1347
        %v1349 = vrot.slane %v1348, 1
        %v1350 = vmax.f32 %v1348, %v1349
        %v1351 = vsel %vm279, %v569, -inf
        %v1352 = vrot.slane %v1351, 4
        %v1353 = vmax.f32 %v1351, %v1352
        %v1354 = vrot.slane %v1353, 2
        %v1355 = vmax.f32 %v1353, %v1354
        %v1356 = vrot.slane %v1355, 1
        %v1357 = vmax.f32 %v1355, %v1356
        %v1358 = vsel %vm279, %v571, -inf
        %v1359 = vrot.slane %v1358, 4
        %v1360 = vmax.f32 %v1358, %v1359
        %v1361 = vrot.slane %v1360, 2
        %v1362 = vmax.f32 %v1360, %v1361
        %v1363 = vrot.slane %v1362, 1
        %v1364 = vmax.f32 %v1362, %v1363
        %v1365 = vsel %vm279, %v579, -inf
        %v1366 = vrot.slane %v1365, 4
        %v1367 = vmax.f32 %v1365, %v1366
        %v1368 = vrot.slane %v1367, 2
        %v1369 = vmax.f32 %v1367, %v1368
        %v1370 = vrot.slane %v1369, 1
        %v1371 = vmax.f32 %v1369, %v1370
        %v1372 = vsel %vm279, %v587, -inf
        %v1373 = vrot.slane %v1372, 4
        %v1374 = vmax.f32 %v1372, %v1373
        %v1375 = vrot.slane %v1374, 2
        %v1376 = vmax.f32 %v1374, %v1375
        %v1377 = vrot.slane %v1376, 1
        %v1378 = vmax.f32 %v1376, %v1377
        %v1379 = vsel %vm279, %v586, -inf
        %v1380 = vrot.slane %v1379, 4
        %v1381 = vmax.f32 %v1379, %v1380
        %v1382 = vrot.slane %v1381, 2
        %v1383 = vmax.f32 %v1381, %v1382
        %v1384 = vrot.slane %v1383, 1
        %v1385 = vmax.f32 %v1383, %v1384
        %v1386 = vsel %vm279, %v588, -inf
        %v1387 = vrot.slane %v1386, 4
        %v1388 = vmax.f32 %v1386, %v1387
        %v1389 = vrot.slane %v1388, 2
        %v1390 = vmax.f32 %v1388, %v1389
        %v1391 = vrot.slane %v1390, 1
        %v1392 = vmax.f32 %v1390, %v1391
        %v1393 = vsel %vm279, %v596, -inf
        %v1394 = vrot.slane %v1393, 4
        %v1395 = vmax.f32 %v1393, %v1394
        %v1396 = vrot.slane %v1395, 2
        %v1397 = vmax.f32 %v1395, %v1396
        %v1398 = vrot.slane %v1397, 1
        %v1399 = vmax.f32 %v1397, %v1398
        %v1400 = vsel %vm279, %v604, -inf
        %v1401 = vrot.slane %v1400, 4
        %v1402 = vmax.f32 %v1400, %v1401
        %v1403 = vrot.slane %v1402, 2
        %v1404 = vmax.f32 %v1402, %v1403
        %v1405 = vrot.slane %v1404, 1
        %v1406 = vmax.f32 %v1404, %v1405
        %v1407 = vsel %vm279, %v603, -inf
        %v1408 = vrot.slane %v1407, 4
        %v1409 = vmax.f32 %v1407, %v1408
        %v1410 = vrot.slane %v1409, 2
        %v1411 = vmax.f32 %v1409, %v1410
        %v1412 = vrot.slane %v1411, 1
        %v1413 = vmax.f32 %v1411, %v1412
        %v1414 = vsel %vm279, %v605, -inf
        %v1415 = vrot.slane %v1414, 4
        %v1416 = vmax.f32 %v1414, %v1415
        %v1417 = vrot.slane %v1416, 2
        %v1418 = vmax.f32 %v1416, %v1417
        %v1419 = vrot.slane %v1418, 1
        %v1420 = vmax.f32 %v1418, %v1419
        %v1421 = vsel %vm279, %v613, -inf
        %v1422 = vrot.slane %v1421, 4
        %v1423 = vmax.f32 %v1421, %v1422
        %v1424 = vrot.slane %v1423, 2
        %v1425 = vmax.f32 %v1423, %v1424
        %v1426 = vrot.slane %v1425, 1
        %v1427 = vmax.f32 %v1425, %v1426
        %v1428 = vsel %vm279, %v621, -inf
        %v1429 = vrot.slane %v1428, 4
        %v1430 = vmax.f32 %v1428, %v1429
        %v1431 = vrot.slane %v1430, 2
        %v1432 = vmax.f32 %v1430, %v1431
        %v1433 = vrot.slane %v1432, 1
        %v1434 = vmax.f32 %v1432, %v1433
        %v1435 = vsel %vm279, %v620, -inf
        %v1436 = vrot.slane %v1435, 4
        %v1437 = vmax.f32 %v1435, %v1436
        %v1438 = vrot.slane %v1437, 2
        %v1439 = vmax.f32 %v1437, %v1438
        %v1440 = vrot.slane %v1439, 1
        %v1441 = vmax.f32 %v1439, %v1440
        %v1442 = vsel %vm279, %v622, -inf
        %v1443 = vrot.slane %v1442, 4
        %v1444 = vmax.f32 %v1442, %v1443
        %v1445 = vrot.slane %v1444, 2
        %v1446 = vmax.f32 %v1444, %v1445
        %v1447 = vrot.slane %v1446, 1
        %v1448 = vmax.f32 %v1446, %v1447
        %v1449 = vsel %vm279, %v630, -inf
        %v1450 = vrot.slane %v1449, 4
        %v1451 = vmax.f32 %v1449, %v1450
        %v1452 = vrot.slane %v1451, 2
        %v1453 = vmax.f32 %v1451, %v1452
        %v1454 = vrot.slane %v1453, 1
        %v1455 = vmax.f32 %v1453, %v1454
        %v1456 = vsel %vm279, %v638, -inf
        %v1457 = vrot.slane %v1456, 4
        %v1458 = vmax.f32 %v1456, %v1457
        %v1459 = vrot.slane %v1458, 2
        %v1460 = vmax.f32 %v1458, %v1459
        %v1461 = vrot.slane %v1460, 1
        %v1462 = vmax.f32 %v1460, %v1461
        %v1463 = vsel %vm279, %v637, -inf
        %v1464 = vrot.slane %v1463, 4
        %v1465 = vmax.f32 %v1463, %v1464
        %v1466 = vrot.slane %v1465, 2
        %v1467 = vmax.f32 %v1465, %v1466
        %v1468 = vrot.slane %v1467, 1
        %v1469 = vmax.f32 %v1467, %v1468
        %v1470 = vsel %vm279, %v639, -inf
        %v1471 = vrot.slane %v1470, 4
        %v1472 = vmax.f32 %v1470, %v1471
        %v1473 = vrot.slane %v1472, 2
        %v1474 = vmax.f32 %v1472, %v1473
        %v1475 = vrot.slane %v1474, 1
        %v1476 = vmax.f32 %v1474, %v1475
        %v1477 = vsel %vm279, %v647, -inf
        %v1478 = vrot.slane %v1477, 4
        %v1479 = vmax.f32 %v1477, %v1478
        %v1480 = vrot.slane %v1479, 2
        %v1481 = vmax.f32 %v1479, %v1480
        %v1482 = vrot.slane %v1481, 1
        %v1483 = vmax.f32 %v1481, %v1482
        %v1484 = vsel %vm279, %v655, -inf
        %v1485 = vrot.slane %v1484, 4
        %v1486 = vmax.f32 %v1484, %v1485
        %v1487 = vrot.slane %v1486, 2
        %v1488 = vmax.f32 %v1486, %v1487
        %v1489 = vrot.slane %v1488, 1
        %v1490 = vmax.f32 %v1488, %v1489
        %v1491 = vsel %vm279, %v654, -inf
        %v1492 = vrot.slane %v1491, 4
        %v1493 = vmax.f32 %v1491, %v1492
        %v1494 = vrot.slane %v1493, 2
        %v1495 = vmax.f32 %v1493, %v1494
        %v1496 = vrot.slane %v1495, 1
        %v1497 = vmax.f32 %v1495, %v1496
        %v1498 = vsel %vm279, %v656, -inf
        %v1499 = vrot.slane %v1498, 4
        %v1500 = vmax.f32 %v1498, %v1499
        %v1501 = vrot.slane %v1500, 2
        %v1502 = vmax.f32 %v1500, %v1501
        %v1503 = vrot.slane %v1502, 1
        %v1504 = vmax.f32 %v1502, %v1503
        %v1505 = vsel %vm279, %v664, -inf
        %v1506 = vrot.slane %v1505, 4
        %v1507 = vmax.f32 %v1505, %v1506
        %v1508 = vrot.slane %v1507, 2
        %v1509 = vmax.f32 %v1507, %v1508
        %v1510 = vrot.slane %v1509, 1
        %v1511 = vmax.f32 %v1509, %v1510
        %v1512 = vsel %vm279, %v672, -inf
        %v1513 = vrot.slane %v1512, 4
        %v1514 = vmax.f32 %v1512, %v1513
        %v1515 = vrot.slane %v1514, 2
        %v1516 = vmax.f32 %v1514, %v1515
        %v1517 = vrot.slane %v1516, 1
        %v1518 = vmax.f32 %v1516, %v1517
        %v1519 = vsel %vm279, %v671, -inf
        %v1520 = vrot.slane %v1519, 4
        %v1521 = vmax.f32 %v1519, %v1520
        %v1522 = vrot.slane %v1521, 2
        %v1523 = vmax.f32 %v1521, %v1522
        %v1524 = vrot.slane %v1523, 1
        %v1525 = vmax.f32 %v1523, %v1524
        %v1526 = vsel %vm279, %v673, -inf
        %v1527 = vrot.slane %v1526, 4
        %v1528 = vmax.f32 %v1526, %v1527
        %v1529 = vrot.slane %v1528, 2
        %v1530 = vmax.f32 %v1528, %v1529
        %v1531 = vrot.slane %v1530, 1
        %v1532 = vmax.f32 %v1530, %v1531
        %v1533 = vsel %vm279, %v681, -inf
        %v1534 = vrot.slane %v1533, 4
        %v1535 = vmax.f32 %v1533, %v1534
        %v1536 = vrot.slane %v1535, 2
        %v1537 = vmax.f32 %v1535, %v1536
        %v1538 = vrot.slane %v1537, 1
        %v1539 = vmax.f32 %v1537, %v1538
        %v1540 = vsel %vm279, %v689, -inf
        %v1541 = vrot.slane %v1540, 4
        %v1542 = vmax.f32 %v1540, %v1541
        %v1543 = vrot.slane %v1542, 2
        %v1544 = vmax.f32 %v1542, %v1543
        %v1545 = vrot.slane %v1544, 1
        %v1546 = vmax.f32 %v1544, %v1545
        %v1547 = vsel %vm279, %v688, -inf
        %v1548 = vrot.slane %v1547, 4
        %v1549 = vmax.f32 %v1547, %v1548
        %v1550 = vrot.slane %v1549, 2
        %v1551 = vmax.f32 %v1549, %v1550
        %v1552 = vrot.slane %v1551, 1
        %v1553 = vmax.f32 %v1551, %v1552
        %v1554 = vsel %vm279, %v690, -inf
        %v1555 = vrot.slane %v1554, 4
        %v1556 = vmax.f32 %v1554, %v1555
        %v1557 = vrot.slane %v1556, 2
        %v1558 = vmax.f32 %v1556, %v1557
        %v1559 = vrot.slane %v1558, 1
        %v1560 = vmax.f32 %v1558, %v1559
        %v1561 = vsel %vm279, %v698, -inf
        %v1562 = vrot.slane %v1561, 4
        %v1563 = vmax.f32 %v1561, %v1562
        %v1564 = vrot.slane %v1563, 2
        %v1565 = vmax.f32 %v1563, %v1564
        %v1566 = vrot.slane %v1565, 1
        %v1567 = vmax.f32 %v1565, %v1566
        %v1568 = vsel %vm279, %v706, -inf
        %v1569 = vrot.slane %v1568, 4
        %v1570 = vmax.f32 %v1568, %v1569
        %v1571 = vrot.slane %v1570, 2
        %v1572 = vmax.f32 %v1570, %v1571
        %v1573 = vrot.slane %v1572, 1
        %v1574 = vmax.f32 %v1572, %v1573
        %v1575 = vsel %vm279, %v705, -inf
        %v1576 = vrot.slane %v1575, 4
        %v1577 = vmax.f32 %v1575, %v1576
        %v1578 = vrot.slane %v1577, 2
        %v1579 = vmax.f32 %v1577, %v1578
        %v1580 = vrot.slane %v1579, 1
        %v1581 = vmax.f32 %v1579, %v1580
        %v1582 = vsel %vm279, %v707, -inf
        %v1583 = vrot.slane %v1582, 4
        %v1584 = vmax.f32 %v1582, %v1583
        %v1585 = vrot.slane %v1584, 2
        %v1586 = vmax.f32 %v1584, %v1585
        %v1587 = vrot.slane %v1586, 1
        %v1588 = vmax.f32 %v1586, %v1587
        %v1589 = vsel %vm279, %v715, -inf
        %v1590 = vrot.slane %v1589, 4
        %v1591 = vmax.f32 %v1589, %v1590
        %v1592 = vrot.slane %v1591, 2
        %v1593 = vmax.f32 %v1591, %v1592
        %v1594 = vrot.slane %v1593, 1
        %v1595 = vmax.f32 %v1593, %v1594
        %v1596 = vsel %vm279, %v723, -inf
        %v1597 = vrot.slane %v1596, 4
        %v1598 = vmax.f32 %v1596, %v1597
        %v1599 = vrot.slane %v1598, 2
        %v1600 = vmax.f32 %v1598, %v1599
        %v1601 = vrot.slane %v1600, 1
        %v1602 = vmax.f32 %v1600, %v1601
        %v1603 = vsel %vm279, %v722, -inf
        %v1604 = vrot.slane %v1603, 4
        %v1605 = vmax.f32 %v1603, %v1604
        %v1606 = vrot.slane %v1605, 2
        %v1607 = vmax.f32 %v1605, %v1606
        %v1608 = vrot.slane %v1607, 1
        %v1609 = vmax.f32 %v1607, %v1608
        %v1610 = vsel %vm279, %v724, -inf
        %v1611 = vrot.slane %v1610, 4
        %v1612 = vmax.f32 %v1610, %v1611
        %v1613 = vrot.slane %v1612, 2
        %v1614 = vmax.f32 %v1612, %v1613
        %v1615 = vrot.slane %v1614, 1
        %v1616 = vmax.f32 %v1614, %v1615
        %v1617 = vsel %vm279, %v732, -inf
        %v1618 = vrot.slane %v1617, 4
        %v1619 = vmax.f32 %v1617, %v1618
        %v1620 = vrot.slane %v1619, 2
        %v1621 = vmax.f32 %v1619, %v1620
        %v1622 = vrot.slane %v1621, 1
        %v1623 = vmax.f32 %v1621, %v1622
        %v1624 = vsel %vm279, %v740, -inf
        %v1625 = vrot.slane %v1624, 4
        %v1626 = vmax.f32 %v1624, %v1625
        %v1627 = vrot.slane %v1626, 2
        %v1628 = vmax.f32 %v1626, %v1627
        %v1629 = vrot.slane %v1628, 1
        %v1630 = vmax.f32 %v1628, %v1629
        %v1631 = vsel %vm279, %v739, -inf
        %v1632 = vrot.slane %v1631, 4
        %v1633 = vmax.f32 %v1631, %v1632
        %v1634 = vrot.slane %v1633, 2
        %v1635 = vmax.f32 %v1633, %v1634
        %v1636 = vrot.slane %v1635, 1
        %v1637 = vmax.f32 %v1635, %v1636
        %v1638 = vsel %vm279, %v741, -inf
        %v1639 = vrot.slane %v1638, 4
        %v1640 = vmax.f32 %v1638, %v1639
        %v1641 = vrot.slane %v1640, 2
        %v1642 = vmax.f32 %v1640, %v1641
        %v1643 = vrot.slane %v1642, 1
        %v1644 = vmax.f32 %v1642, %v1643
        %v1645 = vsel %vm279, %v749, -inf
        %v1646 = vrot.slane %v1645, 4
        %v1647 = vmax.f32 %v1645, %v1646
        %v1648 = vrot.slane %v1647, 2
        %v1649 = vmax.f32 %v1647, %v1648
        %v1650 = vrot.slane %v1649, 1
        %v1651 = vmax.f32 %v1649, %v1650
        %v1652 = vsel %vm279, %v757, -inf
        %v1653 = vrot.slane %v1652, 4
        %v1654 = vmax.f32 %v1652, %v1653
        %v1655 = vrot.slane %v1654, 2
        %v1656 = vmax.f32 %v1654, %v1655
        %v1657 = vrot.slane %v1656, 1
        %v1658 = vmax.f32 %v1656, %v1657
        %v1659 = vsel %vm279, %v756, -inf
        %v1660 = vrot.slane %v1659, 4
        %v1661 = vmax.f32 %v1659, %v1660
        %v1662 = vrot.slane %v1661, 2
        %v1663 = vmax.f32 %v1661, %v1662
        %v1664 = vrot.slane %v1663, 1
        %v1665 = vmax.f32 %v1663, %v1664
        %v1666 = vsel %vm279, %v758, -inf
        %v1667 = vrot.slane %v1666, 4
        %v1668 = vmax.f32 %v1666, %v1667
        %v1669 = vrot.slane %v1668, 2
        %v1670 = vmax.f32 %v1668, %v1669
        %v1671 = vrot.slane %v1670, 1
        %v1672 = vmax.f32 %v1670, %v1671
        %v1673 = vsel %vm279, %v766, -inf
        %v1674 = vrot.slane %v1673, 4
        %v1675 = vmax.f32 %v1673, %v1674
        %v1676 = vrot.slane %v1675, 2
        %v1677 = vmax.f32 %v1675, %v1676
        %v1678 = vrot.slane %v1677, 1
        %v1679 = vmax.f32 %v1677, %v1678
        %v1680 = vsel %vm279, %v774, -inf
        %v1681 = vrot.slane %v1680, 4
        %v1682 = vmax.f32 %v1680, %v1681
        %v1683 = vrot.slane %v1682, 2
        %v1684 = vmax.f32 %v1682, %v1683
        %v1685 = vrot.slane %v1684, 1
        %v1686 = vmax.f32 %v1684, %v1685
        %v1687 = vsel %vm279, %v773, -inf
        %v1688 = vrot.slane %v1687, 4
        %v1689 = vmax.f32 %v1687, %v1688
        %v1690 = vrot.slane %v1689, 2
        %v1691 = vmax.f32 %v1689, %v1690
        %v1692 = vrot.slane %v1691, 1
        %v1693 = vmax.f32 %v1691, %v1692
        %v1694 = vsel %vm279, %v775, -inf
        %v1695 = vrot.slane %v1694, 4
        %v1696 = vmax.f32 %v1694, %v1695
        %v1697 = vrot.slane %v1696, 2
        %v1698 = vmax.f32 %v1696, %v1697
        %v1699 = vrot.slane %v1698, 1
        %v1700 = vmax.f32 %v1698, %v1699
        %v1701 = vsel %vm279, %v783, -inf
        %v1702 = vrot.slane %v1701, 4
        %v1703 = vmax.f32 %v1701, %v1702
        %v1704 = vrot.slane %v1703, 2
        %v1705 = vmax.f32 %v1703, %v1704
        %v1706 = vrot.slane %v1705, 1
        %v1707 = vmax.f32 %v1705, %v1706
        %v1708 = vsel %vm279, %v791, -inf
        %v1709 = vrot.slane %v1708, 4
        %v1710 = vmax.f32 %v1708, %v1709
        %v1711 = vrot.slane %v1710, 2
        %v1712 = vmax.f32 %v1710, %v1711
        %v1713 = vrot.slane %v1712, 1
        %v1714 = vmax.f32 %v1712, %v1713
        %v1715 = vsel %vm279, %v790, -inf
        %v1716 = vrot.slane %v1715, 4
        %v1717 = vmax.f32 %v1715, %v1716
        %v1718 = vrot.slane %v1717, 2
        %v1719 = vmax.f32 %v1717, %v1718
        %v1720 = vrot.slane %v1719, 1
        %v1721 = vmax.f32 %v1719, %v1720
        %v1722 = vsel %vm279, %v792, -inf
        %v1723 = vrot.slane %v1722, 4
        %v1724 = vmax.f32 %v1722, %v1723
        %v1725 = vrot.slane %v1724, 2
        %v1726 = vmax.f32 %v1724, %v1725
        %v1727 = vrot.slane %v1726, 1
        %v1728 = vmax.f32 %v1726, %v1727
        %v1729 = vsel %vm279, %v800, -inf
        %v1730 = vrot.slane %v1729, 4
        %v1731 = vmax.f32 %v1729, %v1730
        %v1732 = vrot.slane %v1731, 2
        %v1733 = vmax.f32 %v1731, %v1732
        %v1734 = vrot.slane %v1733, 1
        %v1735 = vmax.f32 %v1733, %v1734
        %v1736 = vsel %vm279, %v808, -inf
        %v1737 = vrot.slane %v1736, 4
        %v1738 = vmax.f32 %v1736, %v1737
        %v1739 = vrot.slane %v1738, 2
        %v1740 = vmax.f32 %v1738, %v1739
        %v1741 = vrot.slane %v1740, 1
        %v1742 = vmax.f32 %v1740, %v1741
        %v1743 = vsel %vm279, %v807, -inf
        %v1744 = vrot.slane %v1743, 4
        %v1745 = vmax.f32 %v1743, %v1744
        %v1746 = vrot.slane %v1745, 2
        %v1747 = vmax.f32 %v1745, %v1746
        %v1748 = vrot.slane %v1747, 1
        %v1749 = vmax.f32 %v1747, %v1748
        %v1750 = vsel %vm279, %v809, -inf
        %v1751 = vrot.slane %v1750, 4
        %v1752 = vmax.f32 %v1750, %v1751
        %v1753 = vrot.slane %v1752, 2
        %v1754 = vmax.f32 %v1752, %v1753
        %v1755 = vrot.slane %v1754, 1
        %v1756 = vmax.f32 %v1754, %v1755
        %v1757 = vsel %vm279, %v817, -inf
        %v1758 = vrot.slane %v1757, 4
        %v1759 = vmax.f32 %v1757, %v1758
        %v1760 = vrot.slane %v1759, 2
        %v1761 = vmax.f32 %v1759, %v1760
        %v1762 = vrot.slane %v1761, 1
        %v1763 = vmax.f32 %v1761, %v1762
        %v1764 = vsel %vm279, %v825, -inf
        %v1765 = vrot.slane %v1764, 4
        %v1766 = vmax.f32 %v1764, %v1765
        %v1767 = vrot.slane %v1766, 2
        %v1768 = vmax.f32 %v1766, %v1767
        %v1769 = vrot.slane %v1768, 1
        %v1770 = vmax.f32 %v1768, %v1769
        %v1771 = vsel %vm279, %v824, -inf
        %v1772 = vrot.slane %v1771, 4
        %v1773 = vmax.f32 %v1771, %v1772
        %v1774 = vrot.slane %v1773, 2
        %v1775 = vmax.f32 %v1773, %v1774
        %v1776 = vrot.slane %v1775, 1
        %v1777 = vmax.f32 %v1775, %v1776
        %v1778 = vsel %vm279, %v826, -inf
        %v1779 = vrot.slane %v1778, 4
        %v1780 = vmax.f32 %v1778, %v1779
        %v1781 = vrot.slane %v1780, 2
        %v1782 = vmax.f32 %v1780, %v1781
        %v1783 = vrot.slane %v1782, 1
        %v1784 = vmax.f32 %v1782, %v1783
        %v1785 = vsel %vm279, %v834, -inf
        %v1786 = vrot.slane %v1785, 4
        %v1787 = vmax.f32 %v1785, %v1786
        %v1788 = vrot.slane %v1787, 2
        %v1789 = vmax.f32 %v1787, %v1788
        %v1790 = vrot.slane %v1789, 1
        %v1791 = vmax.f32 %v1789, %v1790
        %v1792 = vsel %vm279, %v842, -inf
        %v1793 = vrot.slane %v1792, 4
        %v1794 = vmax.f32 %v1792, %v1793
        %v1795 = vrot.slane %v1794, 2
        %v1796 = vmax.f32 %v1794, %v1795
        %v1797 = vrot.slane %v1796, 1
        %v1798 = vmax.f32 %v1796, %v1797
        %v1799 = vsel %vm279, %v841, -inf
        %v1800 = vrot.slane %v1799, 4
        %v1801 = vmax.f32 %v1799, %v1800
        %v1802 = vrot.slane %v1801, 2
        %v1803 = vmax.f32 %v1801, %v1802
        %v1804 = vrot.slane %v1803, 1
        %v1805 = vmax.f32 %v1803, %v1804
        %v1806 = vsel %vm279, %v843, -inf
        %v1807 = vrot.slane %v1806, 4
        %v1808 = vmax.f32 %v1806, %v1807
        %v1809 = vrot.slane %v1808, 2
        %v1810 = vmax.f32 %v1808, %v1809
        %v1811 = vrot.slane %v1810, 1
        %v1812 = vmax.f32 %v1810, %v1811
        %v1813 = vsel %vm279, %v851, -inf
        %v1814 = vrot.slane %v1813, 4
        %v1815 = vmax.f32 %v1813, %v1814
        %v1816 = vrot.slane %v1815, 2
        %v1817 = vmax.f32 %v1815, %v1816
        %v1818 = vrot.slane %v1817, 1
        %v1819 = vmax.f32 %v1817, %v1818
        %v1820 = vsel %vm279, %v859, -inf
        %v1821 = vrot.slane %v1820, 4
        %v1822 = vmax.f32 %v1820, %v1821
        %v1823 = vrot.slane %v1822, 2
        %v1824 = vmax.f32 %v1822, %v1823
        %v1825 = vrot.slane %v1824, 1
        %v1826 = vmax.f32 %v1824, %v1825
        %v1827 = vsel %vm279, %v858, -inf
        %v1828 = vrot.slane %v1827, 4
        %v1829 = vmax.f32 %v1827, %v1828
        %v1830 = vrot.slane %v1829, 2
        %v1831 = vmax.f32 %v1829, %v1830
        %v1832 = vrot.slane %v1831, 1
        %v1833 = vmax.f32 %v1831, %v1832
        %v1834 = vsel %vm279, %v860, -inf
        %v1835 = vrot.slane %v1834, 4
        %v1836 = vmax.f32 %v1834, %v1835
        %v1837 = vrot.slane %v1836, 2
        %v1838 = vmax.f32 %v1836, %v1837
        %v1839 = vrot.slane %v1838, 1
        %v1840 = vmax.f32 %v1838, %v1839
        %v1841 = vsel %vm279, %v868, -inf
        %v1842 = vrot.slane %v1841, 4
        %v1843 = vmax.f32 %v1841, %v1842
        %v1844 = vrot.slane %v1843, 2
        %v1845 = vmax.f32 %v1843, %v1844
        %v1846 = vrot.slane %v1845, 1
        %v1847 = vmax.f32 %v1845, %v1846
        %v1848 = vsel %vm279, %v876, -inf
        %v1849 = vrot.slane %v1848, 4
        %v1850 = vmax.f32 %v1848, %v1849
        %v1851 = vrot.slane %v1850, 2
        %v1852 = vmax.f32 %v1850, %v1851
        %v1853 = vrot.slane %v1852, 1
        %v1854 = vmax.f32 %v1852, %v1853
        %v1855 = vsel %vm279, %v875, -inf
        %v1856 = vrot.slane %v1855, 4
        %v1857 = vmax.f32 %v1855, %v1856
        %v1858 = vrot.slane %v1857, 2
        %v1859 = vmax.f32 %v1857, %v1858
        %v1860 = vrot.slane %v1859, 1
        %v1861 = vmax.f32 %v1859, %v1860
        %v1862 = vsel %vm279, %v877, -inf
        %v1863 = vrot.slane %v1862, 4
        %v1864 = vmax.f32 %v1862, %v1863
        %v1865 = vrot.slane %v1864, 2
        %v1866 = vmax.f32 %v1864, %v1865
        %v1867 = vrot.slane %v1866, 1
        %v1868 = vmax.f32 %v1866, %v1867
        %v1869 = vsel %vm279, %v885, -inf
        %v1870 = vrot.slane %v1869, 4
        %v1871 = vmax.f32 %v1869, %v1870
        %v1872 = vrot.slane %v1871, 2
        %v1873 = vmax.f32 %v1871, %v1872
        %v1874 = vrot.slane %v1873, 1
        %v1875 = vmax.f32 %v1873, %v1874
        %v1876 = vsel %vm279, %v893, -inf
        %v1877 = vrot.slane %v1876, 4
        %v1878 = vmax.f32 %v1876, %v1877
        %v1879 = vrot.slane %v1878, 2
        %v1880 = vmax.f32 %v1878, %v1879
        %v1881 = vrot.slane %v1880, 1
        %v1882 = vmax.f32 %v1880, %v1881
        %v1883 = vsel %vm279, %v892, -inf
        %v1884 = vrot.slane %v1883, 4
        %v1885 = vmax.f32 %v1883, %v1884
        %v1886 = vrot.slane %v1885, 2
        %v1887 = vmax.f32 %v1885, %v1886
        %v1888 = vrot.slane %v1887, 1
        %v1889 = vmax.f32 %v1887, %v1888
        %v1890 = vsel %vm279, %v894, -inf
        %v1891 = vrot.slane %v1890, 4
        %v1892 = vmax.f32 %v1890, %v1891
        %v1893 = vrot.slane %v1892, 2
        %v1894 = vmax.f32 %v1892, %v1893
        %v1895 = vrot.slane %v1894, 1
        %v1896 = vmax.f32 %v1894, %v1895
        %v1897 = vsel %vm279, %v902, -inf
        %v1898 = vrot.slane %v1897, 4
        %v1899 = vmax.f32 %v1897, %v1898
        %v1900 = vrot.slane %v1899, 2
        %v1901 = vmax.f32 %v1899, %v1900
        %v1902 = vrot.slane %v1901, 1
        %v1903 = vmax.f32 %v1901, %v1902
        %v1904 = vsel %vm279, %v910, -inf
        %v1905 = vrot.slane %v1904, 4
        %v1906 = vmax.f32 %v1904, %v1905
        %v1907 = vrot.slane %v1906, 2
        %v1908 = vmax.f32 %v1906, %v1907
        %v1909 = vrot.slane %v1908, 1
        %v1910 = vmax.f32 %v1908, %v1909
        %v1911 = vsel %vm279, %v909, -inf
        %v1912 = vrot.slane %v1911, 4
        %v1913 = vmax.f32 %v1911, %v1912
        %v1914 = vrot.slane %v1913, 2
        %v1915 = vmax.f32 %v1913, %v1914
        %v1916 = vrot.slane %v1915, 1
        %v1917 = vmax.f32 %v1915, %v1916
        %v1918 = vsel %vm279, %v911, -inf
        %v1919 = vrot.slane %v1918, 4
        %v1920 = vmax.f32 %v1918, %v1919
        %v1921 = vrot.slane %v1920, 2
        %v1922 = vmax.f32 %v1920, %v1921
        %v1923 = vrot.slane %v1922, 1
        %v1924 = vmax.f32 %v1922, %v1923
        %v1925 = vsel %vm279, %v919, -inf
        %v1926 = vrot.slane %v1925, 4
        %v1927 = vmax.f32 %v1925, %v1926
        %v1928 = vrot.slane %v1927, 2
        %v1929 = vmax.f32 %v1927, %v1928
        %v1930 = vrot.slane %v1929, 1
        %v1931 = vmax.f32 %v1929, %v1930
        %v1932 = vsel %vm279, %v927, -inf
        %v1933 = vrot.slane %v1932, 4
        %v1934 = vmax.f32 %v1932, %v1933
        %v1935 = vrot.slane %v1934, 2
        %v1936 = vmax.f32 %v1934, %v1935
        %v1937 = vrot.slane %v1936, 1
        %v1938 = vmax.f32 %v1936, %v1937
        %v1939 = vsel %vm279, %v926, -inf
        %v1940 = vrot.slane %v1939, 4
        %v1941 = vmax.f32 %v1939, %v1940
        %v1942 = vrot.slane %v1941, 2
        %v1943 = vmax.f32 %v1941, %v1942
        %v1944 = vrot.slane %v1943, 1
        %v1945 = vmax.f32 %v1943, %v1944
        %v1946 = vsel %vm279, %v928, -inf
        %v1947 = vrot.slane %v1946, 4
        %v1948 = vmax.f32 %v1946, %v1947
        %v1949 = vrot.slane %v1948, 2
        %v1950 = vmax.f32 %v1948, %v1949
        %v1951 = vrot.slane %v1950, 1
        %v1952 = vmax.f32 %v1950, %v1951
        %v1953 = vsel %vm277, %v1063, -inf
        %v1954 = vsel %vm277, %v1119, -inf
        %v1955 = vmax.f32 %v1953, %v1954
        %v1956 = vsel %vm277, %v1070, -inf
        %v1957 = vsel %vm277, %v1126, -inf
        %v1958 = vmax.f32 %v1956, %v1957
        %v1959 = vsel %vm277, %v1077, -inf
        %v1960 = vsel %vm277, %v1133, -inf
        %v1961 = vmax.f32 %v1959, %v1960
        %v1962 = vsel %vm277, %v1084, -inf
        %v1963 = vsel %vm277, %v1140, -inf
        %v1964 = vmax.f32 %v1962, %v1963
        %v1965 = vsel %vm277, %v1091, -inf
        %v1966 = vsel %vm277, %v1147, -inf
        %v1967 = vmax.f32 %v1965, %v1966
        %v1968 = vsel %vm277, %v1098, -inf
        %v1969 = vsel %vm277, %v1154, -inf
        %v1970 = vmax.f32 %v1968, %v1969
        %v1971 = vsel %vm277, %v1105, -inf
        %v1972 = vsel %vm277, %v1161, -inf
        %v1973 = vmax.f32 %v1971, %v1972
        %v1974 = vsel %vm277, %v1112, -inf
        %v1975 = vsel %vm277, %v1168, -inf
        %v1976 = vmax.f32 %v1974, %v1975
        %v1977 = vsel %vm277, %v1175, -inf
        %v1978 = vsel %vm277, %v1231, -inf
        %v1979 = vmax.f32 %v1977, %v1978
        %v1980 = vsel %vm277, %v1182, -inf
        %v1981 = vsel %vm277, %v1238, -inf
        %v1982 = vmax.f32 %v1980, %v1981
        %v1983 = vsel %vm277, %v1189, -inf
        %v1984 = vsel %vm277, %v1245, -inf
        %v1985 = vmax.f32 %v1983, %v1984
        %v1986 = vsel %vm277, %v1196, -inf
        %v1987 = vsel %vm277, %v1252, -inf
        %v1988 = vmax.f32 %v1986, %v1987
        %v1989 = vsel %vm277, %v1203, -inf
        %v1990 = vsel %vm277, %v1259, -inf
        %v1991 = vmax.f32 %v1989, %v1990
        %v1992 = vsel %vm277, %v1210, -inf
        %v1993 = vsel %vm277, %v1266, -inf
        %v1994 = vmax.f32 %v1992, %v1993
        %v1995 = vsel %vm277, %v1217, -inf
        %v1996 = vsel %vm277, %v1273, -inf
        %v1997 = vmax.f32 %v1995, %v1996
        %v1998 = vsel %vm277, %v1224, -inf
        %v1999 = vsel %vm277, %v1280, -inf
        %v2000 = vmax.f32 %v1998, %v1999
        %v2001 = vsel %vm277, %v1287, -inf
        %v2002 = vsel %vm277, %v1343, -inf
        %v2003 = vmax.f32 %v2001, %v2002
        %v2004 = vsel %vm277, %v1294, -inf
        %v2005 = vsel %vm277, %v1350, -inf
        %v2006 = vmax.f32 %v2004, %v2005
        %v2007 = vsel %vm277, %v1301, -inf
        %v2008 = vsel %vm277, %v1357, -inf
        %v2009 = vmax.f32 %v2007, %v2008
        %v2010 = vsel %vm277, %v1308, -inf
        %v2011 = vsel %vm277, %v1364, -inf
        %v2012 = vmax.f32 %v2010, %v2011
        %v2013 = vsel %vm277, %v1315, -inf
        %v2014 = vsel %vm277, %v1371, -inf
        %v2015 = vmax.f32 %v2013, %v2014
        %v2016 = vsel %vm277, %v1322, -inf
        %v2017 = vsel %vm277, %v1378, -inf
        %v2018 = vmax.f32 %v2016, %v2017
        %v2019 = vsel %vm277, %v1329, -inf
        %v2020 = vsel %vm277, %v1385, -inf
        %v2021 = vmax.f32 %v2019, %v2020
        %v2022 = vsel %vm277, %v1336, -inf
        %v2023 = vsel %vm277, %v1392, -inf
        %v2024 = vmax.f32 %v2022, %v2023
        %v2025 = vsel %vm277, %v1399, -inf
        %v2026 = vsel %vm277, %v1455, -inf
        %v2027 = vmax.f32 %v2025, %v2026
        %v2028 = vsel %vm277, %v1406, -inf
        %v2029 = vsel %vm277, %v1462, -inf
        %v2030 = vmax.f32 %v2028, %v2029
        %v2031 = vsel %vm277, %v1413, -inf
        %v2032 = vsel %vm277, %v1469, -inf
        %v2033 = vmax.f32 %v2031, %v2032
        %v2034 = vsel %vm277, %v1420, -inf
        %v2035 = vsel %vm277, %v1476, -inf
        %v2036 = vmax.f32 %v2034, %v2035
        %v2037 = vsel %vm277, %v1427, -inf
        %v2038 = vsel %vm277, %v1483, -inf
        %v2039 = vmax.f32 %v2037, %v2038
        %v2040 = vsel %vm277, %v1434, -inf
        %v2041 = vsel %vm277, %v1490, -inf
        %v2042 = vmax.f32 %v2040, %v2041
        %v2043 = vsel %vm277, %v1441, -inf
        %v2044 = vsel %vm277, %v1497, -inf
        %v2045 = vmax.f32 %v2043, %v2044
        %v2046 = vsel %vm277, %v1448, -inf
        %v2047 = vsel %vm277, %v1504, -inf
        %v2048 = vmax.f32 %v2046, %v2047
        %v2049 = vsel %vm277, %v1511, -inf
        %v2050 = vsel %vm277, %v1567, -inf
        %v2051 = vmax.f32 %v2049, %v2050
        %v2052 = vsel %vm277, %v1518, -inf
        %v2053 = vsel %vm277, %v1574, -inf
        %v2054 = vmax.f32 %v2052, %v2053
        %v2055 = vsel %vm277, %v1525, -inf
        %v2056 = vsel %vm277, %v1581, -inf
        %v2057 = vmax.f32 %v2055, %v2056
        %v2058 = vsel %vm277, %v1532, -inf
        %v2059 = vsel %vm277, %v1588, -inf
        %v2060 = vmax.f32 %v2058, %v2059
        %v2061 = vsel %vm277, %v1539, -inf
        %v2062 = vsel %vm277, %v1595, -inf
        %v2063 = vmax.f32 %v2061, %v2062
        %v2064 = vsel %vm277, %v1546, -inf
        %v2065 = vsel %vm277, %v1602, -inf
        %v2066 = vmax.f32 %v2064, %v2065
        %v2067 = vsel %vm277, %v1553, -inf
        %v2068 = vsel %vm277, %v1609, -inf
        %v2069 = vmax.f32 %v2067, %v2068
        %v2070 = vsel %vm277, %v1560, -inf
        %v2071 = vsel %vm277, %v1616, -inf
        %v2072 = vmax.f32 %v2070, %v2071
        %v2073 = vsel %vm277, %v1623, -inf
        %v2074 = vsel %vm277, %v1679, -inf
        %v2075 = vmax.f32 %v2073, %v2074
        %v2076 = vsel %vm277, %v1630, -inf
        %v2077 = vsel %vm277, %v1686, -inf
        %v2078 = vmax.f32 %v2076, %v2077
        %v2079 = vsel %vm277, %v1637, -inf
        %v2080 = vsel %vm277, %v1693, -inf
        %v2081 = vmax.f32 %v2079, %v2080
        %v2082 = vsel %vm277, %v1644, -inf
        %v2083 = vsel %vm277, %v1700, -inf
        %v2084 = vmax.f32 %v2082, %v2083
        %v2085 = vsel %vm277, %v1651, -inf
        %v2086 = vsel %vm277, %v1707, -inf
        %v2087 = vmax.f32 %v2085, %v2086
        %v2088 = vsel %vm277, %v1658, -inf
        %v2089 = vsel %vm277, %v1714, -inf
        %v2090 = vmax.f32 %v2088, %v2089
        %v2091 = vsel %vm277, %v1665, -inf
        %v2092 = vsel %vm277, %v1721, -inf
        %v2093 = vmax.f32 %v2091, %v2092
        %v2094 = vsel %vm277, %v1672, -inf
        %v2095 = vsel %vm277, %v1728, -inf
        %v2096 = vmax.f32 %v2094, %v2095
        %v2097 = vsel %vm277, %v1735, -inf
        %v2098 = vsel %vm277, %v1791, -inf
        %v2099 = vmax.f32 %v2097, %v2098
        %v2100 = vsel %vm277, %v1742, -inf
        %v2101 = vsel %vm277, %v1798, -inf
        %v2102 = vmax.f32 %v2100, %v2101
        %v2103 = vsel %vm277, %v1749, -inf
        %v2104 = vsel %vm277, %v1805, -inf
        %v2105 = vmax.f32 %v2103, %v2104
        %v2106 = vsel %vm277, %v1756, -inf
        %v2107 = vsel %vm277, %v1812, -inf
        %v2108 = vmax.f32 %v2106, %v2107
        %v2109 = vsel %vm277, %v1763, -inf
        %v2110 = vsel %vm277, %v1819, -inf
        %v2111 = vmax.f32 %v2109, %v2110
        %v2112 = vsel %vm277, %v1770, -inf
        %v2113 = vsel %vm277, %v1826, -inf
        %v2114 = vmax.f32 %v2112, %v2113
        %v2115 = vsel %vm277, %v1777, -inf
        %v2116 = vsel %vm277, %v1833, -inf
        %v2117 = vmax.f32 %v2115, %v2116
        %v2118 = vsel %vm277, %v1784, -inf
        %v2119 = vsel %vm277, %v1840, -inf
        %v2120 = vmax.f32 %v2118, %v2119
        %v2121 = vsel %vm277, %v1847, -inf
        %v2122 = vsel %vm277, %v1903, -inf
        %v2123 = vmax.f32 %v2121, %v2122
        %v2124 = vsel %vm277, %v1854, -inf
        %v2125 = vsel %vm277, %v1910, -inf
        %v2126 = vmax.f32 %v2124, %v2125
        %v2127 = vsel %vm277, %v1861, -inf
        %v2128 = vsel %vm277, %v1917, -inf
        %v2129 = vmax.f32 %v2127, %v2128
        %v2130 = vsel %vm277, %v1868, -inf
        %v2131 = vsel %vm277, %v1924, -inf
        %v2132 = vmax.f32 %v2130, %v2131
        %v2133 = vsel %vm277, %v1875, -inf
        %v2134 = vsel %vm277, %v1931, -inf
        %v2135 = vmax.f32 %v2133, %v2134
        %v2136 = vsel %vm277, %v1882, -inf
        %v2137 = vsel %vm277, %v1938, -inf
        %v2138 = vmax.f32 %v2136, %v2137
        %v2139 = vsel %vm277, %v1889, -inf
        %v2140 = vsel %vm277, %v1945, -inf
        %v2141 = vmax.f32 %v2139, %v2140
        %v2142 = vsel %vm277, %v1896, -inf
        %v2143 = vsel %vm277, %v1952, -inf
        %v2144 = vmax.f32 %v2142, %v2143
        %vm2209 = vcmask 1041409
        %v2210 = vsel %vm2209, %v1958, %v1955
        %vm2211 = vcmask 1042434
        %v2212 = vsel %vm2211, %v1961, %v2210
        %vm2213 = vcmask 1043459
        %v2214 = vsel %vm2213, %v1964, %v2212
        %vm2215 = vcmask 1044484
        %v2216 = vsel %vm2215, %v1967, %v2214
        %vm2217 = vcmask 1045509
        %v2218 = vsel %vm2217, %v1970, %v2216
        %vm2219 = vcmask 1046534
        %v2220 = vsel %vm2219, %v1973, %v2218
        %vm2221 = vcmask 1047559
        %v2222 = vsel %vm2221, %v1976, %v2220
        %v2223 = vsel %vm2209, %v1982, %v1979
        %v2224 = vsel %vm2211, %v1985, %v2223
        %v2225 = vsel %vm2213, %v1988, %v2224
        %v2226 = vsel %vm2215, %v1991, %v2225
        %v2227 = vsel %vm2217, %v1994, %v2226
        %v2228 = vsel %vm2219, %v1997, %v2227
        %v2229 = vsel %vm2221, %v2000, %v2228
        %v2230 = vsel %vm2209, %v2006, %v2003
        %v2231 = vsel %vm2211, %v2009, %v2230
        %v2232 = vsel %vm2213, %v2012, %v2231
        %v2233 = vsel %vm2215, %v2015, %v2232
        %v2234 = vsel %vm2217, %v2018, %v2233
        %v2235 = vsel %vm2219, %v2021, %v2234
        %v2236 = vsel %vm2221, %v2024, %v2235
        %v2237 = vsel %vm2209, %v2030, %v2027
        %v2238 = vsel %vm2211, %v2033, %v2237
        %v2239 = vsel %vm2213, %v2036, %v2238
        %v2240 = vsel %vm2215, %v2039, %v2239
        %v2241 = vsel %vm2217, %v2042, %v2240
        %v2242 = vsel %vm2219, %v2045, %v2241
        %v2243 = vsel %vm2221, %v2048, %v2242
        %v2244 = vsel %vm2209, %v2054, %v2051
        %v2245 = vsel %vm2211, %v2057, %v2244
        %v2246 = vsel %vm2213, %v2060, %v2245
        %v2247 = vsel %vm2215, %v2063, %v2246
        %v2248 = vsel %vm2217, %v2066, %v2247
        %v2249 = vsel %vm2219, %v2069, %v2248
        %v2250 = vsel %vm2221, %v2072, %v2249
        %v2251 = vsel %vm2209, %v2078, %v2075
        %v2252 = vsel %vm2211, %v2081, %v2251
        %v2253 = vsel %vm2213, %v2084, %v2252
        %v2254 = vsel %vm2215, %v2087, %v2253
        %v2255 = vsel %vm2217, %v2090, %v2254
        %v2256 = vsel %vm2219, %v2093, %v2255
        %v2257 = vsel %vm2221, %v2096, %v2256
        %v2258 = vsel %vm2209, %v2102, %v2099
        %v2259 = vsel %vm2211, %v2105, %v2258
        %v2260 = vsel %vm2213, %v2108, %v2259
        %v2261 = vsel %vm2215, %v2111, %v2260
        %v2262 = vsel %vm2217, %v2114, %v2261
        %v2263 = vsel %vm2219, %v2117, %v2262
        %v2264 = vsel %vm2221, %v2120, %v2263
        %v2265 = vsel %vm2209, %v2126, %v2123
        %v2266 = vsel %vm2211, %v2129, %v2265
        %v2267 = vsel %vm2213, %v2132, %v2266
        %v2268 = vsel %vm2215, %v2135, %v2267
        %v2269 = vsel %vm2217, %v2138, %v2268
        %v2270 = vsel %vm2219, %v2141, %v2269
        %v2271 = vsel %vm2221, %v2144, %v2270
        %s2280 = scalar_lea.vmem [#allocation2], 16
        %2281 = vst.msk [vmem:[%s2280 + $0x1] sm:$0xff] %vm277, %v2222
        %2282 = vst.msk [vmem:[%s2280 + $0x11] sm:$0xff] %vm277, %v2229
        %2283 = vst.msk [vmem:[%s2280 + $0x21] sm:$0xff] %vm277, %v2236
        %2284 = vst.msk [vmem:[%s2280 + $0x31] sm:$0xff] %vm277, %v2243
        %2285 = vst.msk [vmem:[%s2280 + $0x41] sm:$0xff] %vm277, %v2250
        %2286 = vst.msk [vmem:[%s2280 + $0x51] sm:$0xff] %vm277, %v2257
        %2287 = vst.msk [vmem:[%s2280 + $0x61] sm:$0xff] %vm277, %v2264
        %2288 = vst.msk [vmem:[%s2280 + $0x71] sm:$0xff] %vm277, %v2271
        %v2289 = vld [vmem:[#allocation2] sm:$0xff]
        %v2290 = vld [vmem:[#allocation2 + $0x8] sm:$0x3]
        %v2291 = vld [vmem:[#allocation2 + $0x10] sm:$0xff]
        %v2292 = vld [vmem:[#allocation2 + $0x18] sm:$0x3]
        %v2293 = vld [vmem:[#allocation2 + $0x20] sm:$0xff]
        %v2294 = vld [vmem:[#allocation2 + $0x28] sm:$0x3]
        %v2295 = vld [vmem:[#allocation2 + $0x30] sm:$0xff]
        %v2296 = vld [vmem:[#allocation2 + $0x38] sm:$0x3]
        %v2297 = vld [vmem:[#allocation2 + $0x40] sm:$0xff]
        %v2298 = vld [vmem:[#allocation2 + $0x48] sm:$0x3]
        %v2299 = vld [vmem:[#allocation2 + $0x50] sm:$0xff]
        %v2300 = vld [vmem:[#allocation2 + $0x58] sm:$0x3]
        %v2301 = vld [vmem:[#allocation2 + $0x60] sm:$0xff]
        %v2302 = vld [vmem:[#allocation2 + $0x68] sm:$0x3]
        %v2303 = vld [vmem:[#allocation2 + $0x70] sm:$0xff]
        %v2304 = vld [vmem:[#allocation2 + $0x78] sm:$0x3]
        %v2305 = vld [vmem:[#allocation2 + $0x80] sm:$0xff]
        %v2306 = vld [vmem:[#allocation2 + $0x88] sm:$0x3]
        %v2307 = vld [vmem:[#allocation2 + $0x90] sm:$0xff]
        %v2308 = vld [vmem:[#allocation2 + $0x98] sm:$0x3]
        %vm2325 = vcmask 1046528
        %v2326 = vrot.slane %v2289, 1
        %v2327 = vrot.slane %v2290, 1
        %v2328 = vsel %vm2325, %v2326, %v2327
        %v2329 = vrot.slane %v2291, 1
        %v2330 = vrot.slane %v2292, 1
        %v2331 = vsel %vm2325, %v2329, %v2330
        %v2332 = vrot.slane %v2293, 1
        %v2333 = vrot.slane %v2294, 1
        %v2334 = vsel %vm2325, %v2332, %v2333
        %v2335 = vrot.slane %v2295, 1
        %v2336 = vrot.slane %v2296, 1
        %v2337 = vsel %vm2325, %v2335, %v2336
        %v2338 = vrot.slane %v2297, 1
        %v2339 = vrot.slane %v2298, 1
        %v2340 = vsel %vm2325, %v2338, %v2339
        %v2341 = vrot.slane %v2299, 1
        %v2342 = vrot.slane %v2300, 1
        %v2343 = vsel %vm2325, %v2341, %v2342
        %v2344 = vrot.slane %v2301, 1
        %v2345 = vrot.slane %v2302, 1
        %v2346 = vsel %vm2325, %v2344, %v2345
        %v2347 = vrot.slane %v2303, 1
        %v2348 = vrot.slane %v2304, 1
        %v2349 = vsel %vm2325, %v2347, %v2348
        %vm2350 = vcmask 1045504
        %v2351 = vrot.slane %v2289, 2
        %v2352 = vrot.slane %v2290, 2
        %v2353 = vsel %vm2350, %v2351, %v2352
        %v2354 = vrot.slane %v2291, 2
        %v2355 = vrot.slane %v2292, 2
        %v2356 = vsel %vm2350, %v2354, %v2355
        %v2357 = vrot.slane %v2293, 2
        %v2358 = vrot.slane %v2294, 2
        %v2359 = vsel %vm2350, %v2357, %v2358
        %v2360 = vrot.slane %v2295, 2
        %v2361 = vrot.slane %v2296, 2
        %v2362 = vsel %vm2350, %v2360, %v2361
        %v2363 = vrot.slane %v2297, 2
        %v2364 = vrot.slane %v2298, 2
        %v2365 = vsel %vm2350, %v2363, %v2364
        %v2366 = vrot.slane %v2299, 2
        %v2367 = vrot.slane %v2300, 2
        %v2368 = vsel %vm2350, %v2366, %v2367
        %v2369 = vrot.slane %v2301, 2
        %v2370 = vrot.slane %v2302, 2
        %v2371 = vsel %vm2350, %v2369, %v2370
        %v2372 = vrot.slane %v2303, 2
        %v2373 = vrot.slane %v2304, 2
        %v2374 = vsel %vm2350, %v2372, %v2373
        %v2377 = vrot.slane %v2305, 1
        %v2378 = vrot.slane %v2306, 1
        %v2379 = vsel %vm2325, %v2377, %v2378
        %v2380 = vrot.slane %v2305, 2
        %v2381 = vrot.slane %v2306, 2
        %v2382 = vsel %vm2350, %v2380, %v2381
        %v2385 = vrot.slane %v2307, 1
        %v2386 = vrot.slane %v2308, 1
        %v2387 = vsel %vm2325, %v2385, %v2386
        %v2388 = vrot.slane %v2307, 2
        %v2389 = vrot.slane %v2308, 2
        %v2390 = vsel %vm2350, %v2388, %v2389
        %2391 = vrot.lane.b32.xlu0 %v2328, 4
        %v2392 = vpop.permute.xlu0 %2391
        %2393 = vrot.lane.b32.xlu0 %v2331, 4
        %v2394 = vpop.permute.xlu0 %2393
        %2395 = vrot.lane.b32.xlu0 %v2334, 4
        %v2396 = vpop.permute.xlu0 %2395
        %2397 = vrot.lane.b32.xlu0 %v2337, 4
        %v2398 = vpop.permute.xlu0 %2397
        %2399 = vrot.lane.b32.xlu0 %v2340, 4
        %v2400 = vpop.permute.xlu0 %2399
        %2401 = vrot.lane.b32.xlu0 %v2343, 4
        %v2402 = vpop.permute.xlu0 %2401
        %2403 = vrot.lane.b32.xlu0 %v2346, 4
        %v2404 = vpop.permute.xlu0 %2403
        %2405 = vrot.lane.b32.xlu0 %v2349, 4
        %v2406 = vpop.permute.xlu0 %2405
        %2415 = vrot.lane.b32.xlu0 %v2353, 8
        %v2416 = vpop.permute.xlu0 %2415
        %2417 = vrot.lane.b32.xlu0 %v2356, 8
        %v2418 = vpop.permute.xlu0 %2417
        %2419 = vrot.lane.b32.xlu0 %v2359, 8
        %v2420 = vpop.permute.xlu0 %2419
        %2421 = vrot.lane.b32.xlu0 %v2362, 8
        %v2422 = vpop.permute.xlu0 %2421
        %2423 = vrot.lane.b32.xlu0 %v2365, 8
        %v2424 = vpop.permute.xlu0 %2423
        %2425 = vrot.lane.b32.xlu0 %v2368, 8
        %v2426 = vpop.permute.xlu0 %2425
        %2427 = vrot.lane.b32.xlu0 %v2371, 8
        %v2428 = vpop.permute.xlu0 %2427
        %2429 = vrot.lane.b32.xlu0 %v2374, 8
        %v2430 = vpop.permute.xlu0 %2429
        %2439 = vrot.lane.b32.xlu0 %v2291, 12
        %v2440 = vpop.permute.xlu0 %2439
        %2441 = vrot.lane.b32.xlu0 %v2293, 12
        %v2442 = vpop.permute.xlu0 %2441
        %2443 = vrot.lane.b32.xlu0 %v2295, 12
        %v2444 = vpop.permute.xlu0 %2443
        %2445 = vrot.lane.b32.xlu0 %v2297, 12
        %v2446 = vpop.permute.xlu0 %2445
        %2447 = vrot.lane.b32.xlu0 %v2299, 12
        %v2448 = vpop.permute.xlu0 %2447
        %2449 = vrot.lane.b32.xlu0 %v2301, 12
        %v2450 = vpop.permute.xlu0 %2449
        %2451 = vrot.lane.b32.xlu0 %v2303, 12
        %v2452 = vpop.permute.xlu0 %2451
        %2453 = vrot.lane.b32.xlu0 %v2305, 12
        %v2454 = vpop.permute.xlu0 %2453
        %2463 = vrot.lane.b32.xlu0 %v2331, 16
        %v2464 = vpop.permute.xlu0 %2463
        %2465 = vrot.lane.b32.xlu0 %v2334, 16
        %v2466 = vpop.permute.xlu0 %2465
        %2467 = vrot.lane.b32.xlu0 %v2337, 16
        %v2468 = vpop.permute.xlu0 %2467
        %2469 = vrot.lane.b32.xlu0 %v2340, 16
        %v2470 = vpop.permute.xlu0 %2469
        %2471 = vrot.lane.b32.xlu0 %v2343, 16
        %v2472 = vpop.permute.xlu0 %2471
        %2473 = vrot.lane.b32.xlu0 %v2346, 16
        %v2474 = vpop.permute.xlu0 %2473
        %2475 = vrot.lane.b32.xlu0 %v2349, 16
        %v2476 = vpop.permute.xlu0 %2475
        %2477 = vrot.lane.b32.xlu0 %v2379, 16
        %v2478 = vpop.permute.xlu0 %2477
        %2487 = vrot.lane.b32.xlu0 %v2356, 20
        %v2488 = vpop.permute.xlu0 %2487
        %2489 = vrot.lane.b32.xlu0 %v2359, 20
        %v2490 = vpop.permute.xlu0 %2489
        %2491 = vrot.lane.b32.xlu0 %v2362, 20
        %v2492 = vpop.permute.xlu0 %2491
        %2493 = vrot.lane.b32.xlu0 %v2365, 20
        %v2494 = vpop.permute.xlu0 %2493
        %2495 = vrot.lane.b32.xlu0 %v2368, 20
        %v2496 = vpop.permute.xlu0 %2495
        %2497 = vrot.lane.b32.xlu0 %v2371, 20
        %v2498 = vpop.permute.xlu0 %2497
        %2499 = vrot.lane.b32.xlu0 %v2374, 20
        %v2500 = vpop.permute.xlu0 %2499
        %2501 = vrot.lane.b32.xlu0 %v2382, 20
        %v2502 = vpop.permute.xlu0 %2501
        %2511 = vrot.lane.b32.xlu0 %v2293, 24
        %v2512 = vpop.permute.xlu0 %2511
        %2513 = vrot.lane.b32.xlu0 %v2295, 24
        %v2514 = vpop.permute.xlu0 %2513
        %2515 = vrot.lane.b32.xlu0 %v2297, 24
        %v2516 = vpop.permute.xlu0 %2515
        %2517 = vrot.lane.b32.xlu0 %v2299, 24
        %v2518 = vpop.permute.xlu0 %2517
        %2519 = vrot.lane.b32.xlu0 %v2301, 24
        %v2520 = vpop.permute.xlu0 %2519
        %2521 = vrot.lane.b32.xlu0 %v2303, 24
        %v2522 = vpop.permute.xlu0 %2521
        %2523 = vrot.lane.b32.xlu0 %v2305, 24
        %v2524 = vpop.permute.xlu0 %2523
        %2525 = vrot.lane.b32.xlu0 %v2307, 24
        %v2526 = vpop.permute.xlu0 %2525
        %2535 = vrot.lane.b32.xlu0 %v2334, 28
        %v2536 = vpop.permute.xlu0 %2535
        %2537 = vrot.lane.b32.xlu0 %v2337, 28
        %v2538 = vpop.permute.xlu0 %2537
        %2539 = vrot.lane.b32.xlu0 %v2340, 28
        %v2540 = vpop.permute.xlu0 %2539
        %2541 = vrot.lane.b32.xlu0 %v2343, 28
        %v2542 = vpop.permute.xlu0 %2541
        %2543 = vrot.lane.b32.xlu0 %v2346, 28
        %v2544 = vpop.permute.xlu0 %2543
        %2545 = vrot.lane.b32.xlu0 %v2349, 28
        %v2546 = vpop.permute.xlu0 %2545
        %2547 = vrot.lane.b32.xlu0 %v2379, 28
        %v2548 = vpop.permute.xlu0 %2547
        %2549 = vrot.lane.b32.xlu0 %v2387, 28
        %v2550 = vpop.permute.xlu0 %2549
        %2559 = vrot.lane.b32.xlu0 %v2359, 32
        %v2560 = vpop.permute.xlu0 %2559
        %2561 = vrot.lane.b32.xlu0 %v2362, 32
        %v2562 = vpop.permute.xlu0 %2561
        %2563 = vrot.lane.b32.xlu0 %v2365, 32
        %v2564 = vpop.permute.xlu0 %2563
        %2565 = vrot.lane.b32.xlu0 %v2368, 32
        %v2566 = vpop.permute.xlu0 %2565
        %2567 = vrot.lane.b32.xlu0 %v2371, 32
        %v2568 = vpop.permute.xlu0 %2567
        %2569 = vrot.lane.b32.xlu0 %v2374, 32
        %v2570 = vpop.permute.xlu0 %2569
        %2571 = vrot.lane.b32.xlu0 %v2382, 32
        %v2572 = vpop.permute.xlu0 %2571
        %2573 = vrot.lane.b32.xlu0 %v2390, 32
        %v2574 = vpop.permute.xlu0 %2573
        %v2583 = vsel %vm277, %v2289, %v2392
        %v2584 = vsel %vm277, %v2291, %v2394
        %v2585 = vsel %vm277, %v2293, %v2396
        %v2586 = vsel %vm277, %v2295, %v2398
        %v2587 = vsel %vm277, %v2297, %v2400
        %v2588 = vsel %vm277, %v2299, %v2402
        %v2589 = vsel %vm277, %v2301, %v2404
        %v2590 = vsel %vm277, %v2303, %v2406
        %v2591 = vsel %vm299, %v2583, %v2416
        %v2592 = vsel %vm299, %v2584, %v2418
        %v2593 = vsel %vm299, %v2585, %v2420
        %v2594 = vsel %vm299, %v2586, %v2422
        %v2595 = vsel %vm299, %v2587, %v2424
        %v2596 = vsel %vm299, %v2588, %v2426
        %v2597 = vsel %vm299, %v2589, %v2428
        %v2598 = vsel %vm299, %v2590, %v2430
        %vm2599 = vcmask 97280
        %v2600 = vsel %vm2599, %v2591, %v2440
        %v2601 = vsel %vm2599, %v2592, %v2442
        %v2602 = vsel %vm2599, %v2593, %v2444
        %v2603 = vsel %vm2599, %v2594, %v2446
        %v2604 = vsel %vm2599, %v2595, %v2448
        %v2605 = vsel %vm2599, %v2596, %v2450
        %v2606 = vsel %vm2599, %v2597, %v2452
        %v2607 = vsel %vm2599, %v2598, %v2454
        %vm2608 = vcmask 130048
        %v2609 = vsel %vm2608, %v2600, %v2464
        %v2610 = vsel %vm2608, %v2601, %v2466
        %v2611 = vsel %vm2608, %v2602, %v2468
        %v2612 = vsel %vm2608, %v2603, %v2470
        %v2613 = vsel %vm2608, %v2604, %v2472
        %v2614 = vsel %vm2608, %v2605, %v2474
        %v2615 = vsel %vm2608, %v2606, %v2476
        %v2616 = vsel %vm2608, %v2607, %v2478
        %vm2617 = vcmask 162816
        %v2618 = vsel %vm2617, %v2609, %v2488
        %v2619 = vsel %vm2617, %v2610, %v2490
        %v2620 = vsel %vm2617, %v2611, %v2492
        %v2621 = vsel %vm2617, %v2612, %v2494
        %v2622 = vsel %vm2617, %v2613, %v2496
        %v2623 = vsel %vm2617, %v2614, %v2498
        %v2624 = vsel %vm2617, %v2615, %v2500
        %v2625 = vsel %vm2617, %v2616, %v2502
        %vm2626 = vcmask 195584
        %v2627 = vsel %vm2626, %v2618, %v2512
        %v2628 = vsel %vm2626, %v2619, %v2514
        %v2629 = vsel %vm2626, %v2620, %v2516
        %v2630 = vsel %vm2626, %v2621, %v2518
        %v2631 = vsel %vm2626, %v2622, %v2520
        %v2632 = vsel %vm2626, %v2623, %v2522
        %v2633 = vsel %vm2626, %v2624, %v2524
        %v2634 = vsel %vm2626, %v2625, %v2526
        %vm2635 = vcmask 228352
        %v2636 = vsel %vm2635, %v2627, %v2536
        %v2637 = vsel %vm2635, %v2628, %v2538
        %v2638 = vsel %vm2635, %v2629, %v2540
        %v2639 = vsel %vm2635, %v2630, %v2542
        %v2640 = vsel %vm2635, %v2631, %v2544
        %v2641 = vsel %vm2635, %v2632, %v2546
        %v2642 = vsel %vm2635, %v2633, %v2548
        %v2643 = vsel %vm2635, %v2634, %v2550
        %vm2644 = vcmask 261120
        %v2645 = vsel %vm2644, %v2636, %v2560
        %v2646 = vsel %vm2644, %v2637, %v2562
        %v2647 = vsel %vm2644, %v2638, %v2564
        %v2648 = vsel %vm2644, %v2639, %v2566
        %v2649 = vsel %vm2644, %v2640, %v2568
        %v2650 = vsel %vm2644, %v2641, %v2570
        %v2651 = vsel %vm2644, %v2642, %v2572
        %v2652 = vsel %vm2644, %v2643, %v2574
        %v2653 = vld [vmem:[%s1] sm:$0xff]
        %v2654 = vld [vmem:[%s1 + $0x8] sm:$0xff]
        %v2655 = vld [vmem:[%s1 + $0x10] sm:$0xff]
        %v2656 = vld [vmem:[%s1 + $0x18] sm:$0xff]
        %v2657 = vld [vmem:[%s1 + $0x20] sm:$0xf]
        %vm2658 = vcmask 293888
        %v2660 = vsel %vm2658, %v2645, 0
        %v2663 = vsel %vm2658, %v2646, 0
        %v2666 = vsel %vm2658, %v2647, 0
        %v2669 = vsel %vm2658, %v2648, 0
        %v2672 = vsel %vm2658, %v2649, 0
        %v2675 = vsel %vm2658, %v2650, 0
        %v2678 = vsel %vm2658, %v2651, 0
        %v2681 = vsel %vm2658, %v2652, 0
        %vm2683 = vcmask 1043456
        %v2685 = vsel %vm2683, %v2657, 0
        %2687 = vmatprep.subr.mxu0 0.0
        %2688 = vmatpush1.msra.mxu0 0.0
        %2689 = vmatprep.subr.mxu0 0.0
        %2690 = vmatpush1.msra.mxu0 0.0
        %2691 = vmatprep.subr.mxu0 0.0
        %2692 = vmatpush1.msra.mxu0 0.0
        %2693 = vmatprep.subr.mxu0 0.0
        %2694 = vmatpush1.msra.mxu0 0.0
        %2695 = vmatprep.subr.mxu0 0.0
        %2696 = vmatpush1.msra.mxu0 0.0
        %2697 = vmatprep.subr.mxu0 0.0
        %2698 = vmatpush1.msra.mxu0 0.0
        %2699 = vmatprep.subr.mxu0 0.0
        %2700 = vmatpush1.msra.mxu0 0.0
        %2701 = vmatprep.subr.mxu0 0.0
        %2702 = vmatpush1.msra.mxu0 0.0
        %2703 = vmatprep.subr.mxu0 0.0
        %2704 = vmatpush1.msra.mxu0 0.0
        %2705 = vmatprep.subr.mxu0 0.0
        %2706 = vmatpush1.msra.mxu0 0.0
        %2707 = vmatprep.subr.mxu0 0.0
        %2708 = vmatpush1.msra.mxu0 0.0
        %2709 = vmatprep.subr.mxu0 0.0
        %2710 = vmatpush1.msra.mxu0 %v2685
        %2711 = vmatprep.subr.mxu0 0.0
        %2712 = vmatpush1.msra.mxu0 %v2656
        %2713 = vmatprep.subr.mxu0 0.0
        %2714 = vmatpush1.msra.mxu0 %v2655
        %2715 = vmatprep.subr.mxu0 0.0
        %2716 = vmatpush1.msra.mxu0 %v2654
        %2717 = vmatprep.subr.mxu0 0.0
        %2718 = vmatpush1.msra.mxu0 %v2653
        %2719 = vmatprep.subr.mxu0 0.0
        %2720 = vmatpush2.msra.mxu0 0.0
        %2721 = vmatprep.subr.mxu0 0.0
        %2722 = vmatpush2.msra.mxu0 0.0
        %2723 = vmatprep.subr.mxu0 0.0
        %2724 = vmatpush2.msra.mxu0 0.0
        %2725 = vmatprep.subr.mxu0 0.0
        %2726 = vmatpush2.msra.mxu0 0.0
        %2727 = vmatprep.subr.mxu0 0.0
        %2728 = vmatpush2.msra.mxu0 0.0
        %2729 = vmatprep.subr.mxu0 0.0
        %2730 = vmatpush2.msra.mxu0 0.0
        %2731 = vmatprep.subr.mxu0 0.0
        %2732 = vmatpush2.msra.mxu0 0.0
        %2733 = vmatprep.subr.mxu0 0.0
        %2734 = vmatpush2.msra.mxu0 0.0
        %2735 = vmatprep.subr.mxu0 0.0
        %2736 = vmatpush2.msra.mxu0 0.0
        %2737 = vmatprep.subr.mxu0 0.0
        %2738 = vmatpush2.msra.mxu0 0.0
        %2739 = vmatprep.subr.mxu0 0.0
        %2740 = vmatpush2.msra.mxu0 0.0
        %2741 = vmatprep.subr.mxu0 0.0
        %2742 = vmatpush2.msra.mxu0 0.0
        %2743 = vmatprep.subr.mxu0 0.0
        %2744 = vmatpush2.msra.mxu0 0.0
        %2745 = vmatprep.subr.mxu0 0.0
        %2746 = vmatpush2.msra.mxu0 0.0
        %2747 = vmatprep.subr.mxu0 0.0
        %2748 = vmatpush2.msra.mxu0 0.0
        %2749 = vmatprep.subr.mxu0 0.0
        %2750 = vmatpush2.msra.mxu0 0.0
        %2751 = vmatprep.mubr.f32.mxu0 0.0
        %2752 = vmatmul.mubr.f32.gmra.mxu0 %v2660
        %v2753 = vpop.f32.mrf.mxu0
        %v2754 = vadd.f32 0.0, %v2753
        %v2755 = vpop.f32.mrf.mxu0
        %2756 = vmatprep.mubr.f32.mxu0 0.0
        %2757 = vmatmul.mubr.f32.gmra.mxu0 %v2663
        %v2758 = vpop.f32.mrf.mxu0
        %v2759 = vadd.f32 0.0, %v2758
        %v2760 = vpop.f32.mrf.mxu0
        %2761 = vmatprep.mubr.f32.mxu0 0.0
        %2762 = vmatmul.mubr.f32.gmra.mxu0 %v2666
        %v2763 = vpop.f32.mrf.mxu0
        %v2764 = vadd.f32 0.0, %v2763
        %v2765 = vpop.f32.mrf.mxu0
        %2766 = vmatprep.mubr.f32.mxu0 0.0
        %2767 = vmatmul.mubr.f32.gmra.mxu0 %v2669
        %v2768 = vpop.f32.mrf.mxu0
        %v2769 = vadd.f32 0.0, %v2768
        %v2770 = vpop.f32.mrf.mxu0
        %2771 = vmatprep.mubr.f32.mxu0 0.0
        %2772 = vmatmul.mubr.f32.gmra.mxu0 %v2672
        %v2773 = vpop.f32.mrf.mxu0
        %v2774 = vadd.f32 0.0, %v2773
        %v2775 = vpop.f32.mrf.mxu0
        %2776 = vmatprep.mubr.f32.mxu0 0.0
        %2777 = vmatmul.mubr.f32.gmra.mxu0 %v2675
        %v2778 = vpop.f32.mrf.mxu0
        %v2779 = vadd.f32 0.0, %v2778
        %v2780 = vpop.f32.mrf.mxu0
        %2781 = vmatprep.mubr.f32.mxu0 0.0
        %2782 = vmatmul.mubr.f32.gmra.mxu0 %v2678
        %v2783 = vpop.f32.mrf.mxu0
        %v2784 = vadd.f32 0.0, %v2783
        %v2785 = vpop.f32.mrf.mxu0
        %2786 = vmatprep.mubr.f32.mxu0 0.0
        %2787 = vmatmul.mubr.f32.gmra.mxu0 %v2681
        %v2788 = vpop.f32.mrf.mxu0
        %v2789 = vadd.f32 0.0, %v2788
        %v2790 = vpop.f32.mrf.mxu0
        %2791 = vdwg.mxu0
        %v2792 = vld [vmem:[%s2] sm:$0x1]
        %v2794 = vlaneseq
        %v2795 = vshrl.u32 %v2794, 7
        %v2796 = vsub.s32 0, %v2795
        %v2797 = vrot.slane %v2792, %v2796
        %v2799 = vmul.f32 %v2754, %v2797
        %v2800 = vmul.f32 %v2759, %v2797
        %v2801 = vmul.f32 %v2764, %v2797
        %v2802 = vmul.f32 %v2769, %v2797
        %v2803 = vmul.f32 %v2774, %v2797
        %v2804 = vmul.f32 %v2779, %v2797
        %v2805 = vmul.f32 %v2784, %v2797
        %v2806 = vmul.f32 %v2789, %v2797
        %v2807 = vld [vmem:[%s3] sm:$0x1]
        %v2809 = vlaneseq
        %v2810 = vshrl.u32 %v2809, 7
        %v2811 = vsub.s32 0, %v2810
        %v2812 = vrot.slane %v2807, %v2811
        %v2814 = vadd.f32 %v2799, %v2812
        %v2815 = vadd.f32 %v2800, %v2812
        %v2816 = vadd.f32 %v2801, %v2812
        %v2817 = vadd.f32 %v2802, %v2812
        %v2818 = vadd.f32 %v2803, %v2812
        %v2819 = vadd.f32 %v2804, %v2812
        %v2820 = vadd.f32 %v2805, %v2812
        %v2821 = vadd.f32 %v2806, %v2812
        %v2822 = vmax.f32 %v2814, 0.0
        %v2823 = vmax.f32 %v2815, 0.0
        %v2824 = vmax.f32 %v2816, 0.0
        %v2825 = vmax.f32 %v2817, 0.0
        %v2826 = vmax.f32 %v2818, 0.0
        %v2827 = vmax.f32 %v2819, 0.0
        %v2828 = vmax.f32 %v2820, 0.0
        %v2829 = vmax.f32 %v2821, 0.0
        %s2830 = scalar_lea.vmem [#allocation3], 16
        %2831 = vst.msk [vmem:[%s2830 + $0x1] sm:$0xff] %vm299, %v2822
        %2832 = vst.msk [vmem:[%s2830 + $0x11] sm:$0xff] %vm299, %v2823
        %2833 = vst.msk [vmem:[%s2830 + $0x21] sm:$0xff] %vm299, %v2824
        %2834 = vst.msk [vmem:[%s2830 + $0x31] sm:$0xff] %vm299, %v2825
        %2835 = vst.msk [vmem:[%s2830 + $0x41] sm:$0xff] %vm299, %v2826
        %2836 = vst.msk [vmem:[%s2830 + $0x51] sm:$0xff] %vm299, %v2827
        %2837 = vst.msk [vmem:[%s2830 + $0x61] sm:$0xff] %vm299, %v2828
        %2838 = vst.msk [vmem:[%s2830 + $0x71] sm:$0xff] %vm299, %v2829
        %v2839 = vld [vmem:[#allocation3] sm:$0xff]
        %v2840 = vld [vmem:[#allocation3 + $0x8] sm:$0x3]
        %v2841 = vld [vmem:[#allocation3 + $0x10] sm:$0xff]
        %v2842 = vld [vmem:[#allocation3 + $0x18] sm:$0x3]
        %v2843 = vld [vmem:[#allocation3 + $0x20] sm:$0xff]
        %v2844 = vld [vmem:[#allocation3 + $0x28] sm:$0x3]
        %v2845 = vld [vmem:[#allocation3 + $0x30] sm:$0xff]
        %v2846 = vld [vmem:[#allocation3 + $0x38] sm:$0x3]
        %v2847 = vld [vmem:[#allocation3 + $0x40] sm:$0xff]
        %v2848 = vld [vmem:[#allocation3 + $0x48] sm:$0x3]
        %v2849 = vld [vmem:[#allocation3 + $0x50] sm:$0xff]
        %v2850 = vld [vmem:[#allocation3 + $0x58] sm:$0x3]
        %v2851 = vld [vmem:[#allocation3 + $0x60] sm:$0xff]
        %v2852 = vld [vmem:[#allocation3 + $0x68] sm:$0x3]
        %v2853 = vld [vmem:[#allocation3 + $0x70] sm:$0xff]
        %v2854 = vld [vmem:[#allocation3 + $0x78] sm:$0x3]
        %v2855 = vld [vmem:[#allocation3 + $0x80] sm:$0xff]
        %v2856 = vld [vmem:[#allocation3 + $0x88] sm:$0x3]
        %v2857 = vld [vmem:[#allocation3 + $0x90] sm:$0xff]
        %v2858 = vld [vmem:[#allocation3 + $0x98] sm:$0x3]
        %v2875 = vrot.slane %v2839, 1
        %v2876 = vrot.slane %v2840, 1
        %v2877 = vsel %vm2325, %v2875, %v2876
        %v2878 = vrot.slane %v2841, 1
        %v2879 = vrot.slane %v2842, 1
        %v2880 = vsel %vm2325, %v2878, %v2879
        %v2881 = vrot.slane %v2843, 1
        %v2882 = vrot.slane %v2844, 1
        %v2883 = vsel %vm2325, %v2881, %v2882
        %v2884 = vrot.slane %v2845, 1
        %v2885 = vrot.slane %v2846, 1
        %v2886 = vsel %vm2325, %v2884, %v2885
        %v2887 = vrot.slane %v2847, 1
        %v2888 = vrot.slane %v2848, 1
        %v2889 = vsel %vm2325, %v2887, %v2888
        %v2890 = vrot.slane %v2849, 1
        %v2891 = vrot.slane %v2850, 1
        %v2892 = vsel %vm2325, %v2890, %v2891
        %v2893 = vrot.slane %v2851, 1
        %v2894 = vrot.slane %v2852, 1
        %v2895 = vsel %vm2325, %v2893, %v2894
        %v2896 = vrot.slane %v2853, 1
        %v2897 = vrot.slane %v2854, 1
        %v2898 = vsel %vm2325, %v2896, %v2897
        %v2899 = vrot.slane %v2839, 2
        %v2900 = vrot.slane %v2840, 2
        %v2901 = vsel %vm2350, %v2899, %v2900
        %v2902 = vrot.slane %v2841, 2
        %v2903 = vrot.slane %v2842, 2
        %v2904 = vsel %vm2350, %v2902, %v2903
        %v2905 = vrot.slane %v2843, 2
        %v2906 = vrot.slane %v2844, 2
        %v2907 = vsel %vm2350, %v2905, %v2906
        %v2908 = vrot.slane %v2845, 2
        %v2909 = vrot.slane %v2846, 2
        %v2910 = vsel %vm2350, %v2908, %v2909
        %v2911 = vrot.slane %v2847, 2
        %v2912 = vrot.slane %v2848, 2
        %v2913 = vsel %vm2350, %v2911, %v2912
        %v2914 = vrot.slane %v2849, 2
        %v2915 = vrot.slane %v2850, 2
        %v2916 = vsel %vm2350, %v2914, %v2915
        %v2917 = vrot.slane %v2851, 2
        %v2918 = vrot.slane %v2852, 2
        %v2919 = vsel %vm2350, %v2917, %v2918
        %v2920 = vrot.slane %v2853, 2
        %v2921 = vrot.slane %v2854, 2
        %v2922 = vsel %vm2350, %v2920, %v2921
        %v2925 = vrot.slane %v2855, 1
        %v2926 = vrot.slane %v2856, 1
        %v2927 = vsel %vm2325, %v2925, %v2926
        %v2928 = vrot.slane %v2855, 2
        %v2929 = vrot.slane %v2856, 2
        %v2930 = vsel %vm2350, %v2928, %v2929
        %v2933 = vrot.slane %v2857, 1
        %v2934 = vrot.slane %v2858, 1
        %v2935 = vsel %vm2325, %v2933, %v2934
        %v2936 = vrot.slane %v2857, 2
        %v2937 = vrot.slane %v2858, 2
        %v2938 = vsel %vm2350, %v2936, %v2937
        %2939 = vrot.lane.b32.xlu0 %v2877, 8
        %v2940 = vpop.permute.xlu0 %2939
        %2941 = vrot.lane.b32.xlu0 %v2880, 8
        %v2942 = vpop.permute.xlu0 %2941
        %2943 = vrot.lane.b32.xlu0 %v2883, 8
        %v2944 = vpop.permute.xlu0 %2943
        %2945 = vrot.lane.b32.xlu0 %v2886, 8
        %v2946 = vpop.permute.xlu0 %2945
        %2947 = vrot.lane.b32.xlu0 %v2889, 8
        %v2948 = vpop.permute.xlu0 %2947
        %2949 = vrot.lane.b32.xlu0 %v2892, 8
        %v2950 = vpop.permute.xlu0 %2949
        %2951 = vrot.lane.b32.xlu0 %v2895, 8
        %v2952 = vpop.permute.xlu0 %2951
        %2953 = vrot.lane.b32.xlu0 %v2898, 8
        %v2954 = vpop.permute.xlu0 %2953
        %2963 = vrot.lane.b32.xlu0 %v2901, 16
        %v2964 = vpop.permute.xlu0 %2963
        %2965 = vrot.lane.b32.xlu0 %v2904, 16
        %v2966 = vpop.permute.xlu0 %2965
        %2967 = vrot.lane.b32.xlu0 %v2907, 16
        %v2968 = vpop.permute.xlu0 %2967
        %2969 = vrot.lane.b32.xlu0 %v2910, 16
        %v2970 = vpop.permute.xlu0 %2969
        %2971 = vrot.lane.b32.xlu0 %v2913, 16
        %v2972 = vpop.permute.xlu0 %2971
        %2973 = vrot.lane.b32.xlu0 %v2916, 16
        %v2974 = vpop.permute.xlu0 %2973
        %2975 = vrot.lane.b32.xlu0 %v2919, 16
        %v2976 = vpop.permute.xlu0 %2975
        %2977 = vrot.lane.b32.xlu0 %v2922, 16
        %v2978 = vpop.permute.xlu0 %2977
        %2987 = vrot.lane.b32.xlu0 %v2841, 24
        %v2988 = vpop.permute.xlu0 %2987
        %2989 = vrot.lane.b32.xlu0 %v2843, 24
        %v2990 = vpop.permute.xlu0 %2989
        %2991 = vrot.lane.b32.xlu0 %v2845, 24
        %v2992 = vpop.permute.xlu0 %2991
        %2993 = vrot.lane.b32.xlu0 %v2847, 24
        %v2994 = vpop.permute.xlu0 %2993
        %2995 = vrot.lane.b32.xlu0 %v2849, 24
        %v2996 = vpop.permute.xlu0 %2995
        %2997 = vrot.lane.b32.xlu0 %v2851, 24
        %v2998 = vpop.permute.xlu0 %2997
        %2999 = vrot.lane.b32.xlu0 %v2853, 24
        %v3000 = vpop.permute.xlu0 %2999
        %3001 = vrot.lane.b32.xlu0 %v2855, 24
        %v3002 = vpop.permute.xlu0 %3001
        %3011 = vrot.lane.b32.xlu0 %v2880, 32
        %v3012 = vpop.permute.xlu0 %3011
        %3013 = vrot.lane.b32.xlu0 %v2883, 32
        %v3014 = vpop.permute.xlu0 %3013
        %3015 = vrot.lane.b32.xlu0 %v2886, 32
        %v3016 = vpop.permute.xlu0 %3015
        %3017 = vrot.lane.b32.xlu0 %v2889, 32
        %v3018 = vpop.permute.xlu0 %3017
        %3019 = vrot.lane.b32.xlu0 %v2892, 32
        %v3020 = vpop.permute.xlu0 %3019
        %3021 = vrot.lane.b32.xlu0 %v2895, 32
        %v3022 = vpop.permute.xlu0 %3021
        %3023 = vrot.lane.b32.xlu0 %v2898, 32
        %v3024 = vpop.permute.xlu0 %3023
        %3025 = vrot.lane.b32.xlu0 %v2927, 32
        %v3026 = vpop.permute.xlu0 %3025
        %3035 = vrot.lane.b32.xlu0 %v2904, 40
        %v3036 = vpop.permute.xlu0 %3035
        %3037 = vrot.lane.b32.xlu0 %v2907, 40
        %v3038 = vpop.permute.xlu0 %3037
        %3039 = vrot.lane.b32.xlu0 %v2910, 40
        %v3040 = vpop.permute.xlu0 %3039
        %3041 = vrot.lane.b32.xlu0 %v2913, 40
        %v3042 = vpop.permute.xlu0 %3041
        %3043 = vrot.lane.b32.xlu0 %v2916, 40
        %v3044 = vpop.permute.xlu0 %3043
        %3045 = vrot.lane.b32.xlu0 %v2919, 40
        %v3046 = vpop.permute.xlu0 %3045
        %3047 = vrot.lane.b32.xlu0 %v2922, 40
        %v3048 = vpop.permute.xlu0 %3047
        %3049 = vrot.lane.b32.xlu0 %v2930, 40
        %v3050 = vpop.permute.xlu0 %3049
        %3059 = vrot.lane.b32.xlu0 %v2843, 48
        %v3060 = vpop.permute.xlu0 %3059
        %3061 = vrot.lane.b32.xlu0 %v2845, 48
        %v3062 = vpop.permute.xlu0 %3061
        %3063 = vrot.lane.b32.xlu0 %v2847, 48
        %v3064 = vpop.permute.xlu0 %3063
        %3065 = vrot.lane.b32.xlu0 %v2849, 48
        %v3066 = vpop.permute.xlu0 %3065
        %3067 = vrot.lane.b32.xlu0 %v2851, 48
        %v3068 = vpop.permute.xlu0 %3067
        %3069 = vrot.lane.b32.xlu0 %v2853, 48
        %v3070 = vpop.permute.xlu0 %3069
        %3071 = vrot.lane.b32.xlu0 %v2855, 48
        %v3072 = vpop.permute.xlu0 %3071
        %3073 = vrot.lane.b32.xlu0 %v2857, 48
        %v3074 = vpop.permute.xlu0 %3073
        %3083 = vrot.lane.b32.xlu0 %v2883, 56
        %v3084 = vpop.permute.xlu0 %3083
        %3085 = vrot.lane.b32.xlu0 %v2886, 56
        %v3086 = vpop.permute.xlu0 %3085
        %3087 = vrot.lane.b32.xlu0 %v2889, 56
        %v3088 = vpop.permute.xlu0 %3087
        %3089 = vrot.lane.b32.xlu0 %v2892, 56
        %v3090 = vpop.permute.xlu0 %3089
        %3091 = vrot.lane.b32.xlu0 %v2895, 56
        %v3092 = vpop.permute.xlu0 %3091
        %3093 = vrot.lane.b32.xlu0 %v2898, 56
        %v3094 = vpop.permute.xlu0 %3093
        %3095 = vrot.lane.b32.xlu0 %v2927, 56
        %v3096 = vpop.permute.xlu0 %3095
        %3097 = vrot.lane.b32.xlu0 %v2935, 56
        %v3098 = vpop.permute.xlu0 %3097
        %3107 = vrot.lane.b32.xlu0 %v2907, 64
        %v3108 = vpop.permute.xlu0 %3107
        %3109 = vrot.lane.b32.xlu0 %v2910, 64
        %v3110 = vpop.permute.xlu0 %3109
        %3111 = vrot.lane.b32.xlu0 %v2913, 64
        %v3112 = vpop.permute.xlu0 %3111
        %3113 = vrot.lane.b32.xlu0 %v2916, 64
        %v3114 = vpop.permute.xlu0 %3113
        %3115 = vrot.lane.b32.xlu0 %v2919, 64
        %v3116 = vpop.permute.xlu0 %3115
        %3117 = vrot.lane.b32.xlu0 %v2922, 64
        %v3118 = vpop.permute.xlu0 %3117
        %3119 = vrot.lane.b32.xlu0 %v2930, 64
        %v3120 = vpop.permute.xlu0 %3119
        %3121 = vrot.lane.b32.xlu0 %v2938, 64
        %v3122 = vpop.permute.xlu0 %3121
        %v3131 = vsel %vm299, %v2839, %v2940
        %v3132 = vsel %vm299, %v2841, %v2942
        %v3133 = vsel %vm299, %v2843, %v2944
        %v3134 = vsel %vm299, %v2845, %v2946
        %v3135 = vsel %vm299, %v2847, %v2948
        %v3136 = vsel %vm299, %v2849, %v2950
        %v3137 = vsel %vm299, %v2851, %v2952
        %v3138 = vsel %vm299, %v2853, %v2954
        %v3139 = vsel %vm2608, %v3131, %v2964
        %v3140 = vsel %vm2608, %v3132, %v2966
        %v3141 = vsel %vm2608, %v3133, %v2968
        %v3142 = vsel %vm2608, %v3134, %v2970
        %v3143 = vsel %vm2608, %v3135, %v2972
        %v3144 = vsel %vm2608, %v3136, %v2974
        %v3145 = vsel %vm2608, %v3137, %v2976
        %v3146 = vsel %vm2608, %v3138, %v2978
        %v3147 = vsel %vm2626, %v3139, %v2988
        %v3148 = vsel %vm2626, %v3140, %v2990
        %v3149 = vsel %vm2626, %v3141, %v2992
        %v3150 = vsel %vm2626, %v3142, %v2994
        %v3151 = vsel %vm2626, %v3143, %v2996
        %v3152 = vsel %vm2626, %v3144, %v2998
        %v3153 = vsel %vm2626, %v3145, %v3000
        %v3154 = vsel %vm2626, %v3146, %v3002
        %v3155 = vsel %vm2644, %v3147, %v3012
        %v3156 = vsel %vm2644, %v3148, %v3014
        %v3157 = vsel %vm2644, %v3149, %v3016
        %v3158 = vsel %vm2644, %v3150, %v3018
        %v3159 = vsel %vm2644, %v3151, %v3020
        %v3160 = vsel %vm2644, %v3152, %v3022
        %v3161 = vsel %vm2644, %v3153, %v3024
        %v3162 = vsel %vm2644, %v3154, %v3026
        %vm3163 = vcmask 326656
        %v3164 = vsel %vm3163, %v3155, %v3036
        %v3165 = vsel %vm3163, %v3156, %v3038
        %v3166 = vsel %vm3163, %v3157, %v3040
        %v3167 = vsel %vm3163, %v3158, %v3042
        %v3168 = vsel %vm3163, %v3159, %v3044
        %v3169 = vsel %vm3163, %v3160, %v3046
        %v3170 = vsel %vm3163, %v3161, %v3048
        %v3171 = vsel %vm3163, %v3162, %v3050
        %vm3172 = vcmask 392192
        %v3173 = vsel %vm3172, %v3164, %v3060
        %v3174 = vsel %vm3172, %v3165, %v3062
        %v3175 = vsel %vm3172, %v3166, %v3064
        %v3176 = vsel %vm3172, %v3167, %v3066
        %v3177 = vsel %vm3172, %v3168, %v3068
        %v3178 = vsel %vm3172, %v3169, %v3070
        %v3179 = vsel %vm3172, %v3170, %v3072
        %v3180 = vsel %vm3172, %v3171, %v3074
        %vm3181 = vcmask 457728
        %v3182 = vsel %vm3181, %v3173, %v3084
        %v3183 = vsel %vm3181, %v3174, %v3086
        %v3184 = vsel %vm3181, %v3175, %v3088
        %v3185 = vsel %vm3181, %v3176, %v3090
        %v3186 = vsel %vm3181, %v3177, %v3092
        %v3187 = vsel %vm3181, %v3178, %v3094
        %v3188 = vsel %vm3181, %v3179, %v3096
        %v3189 = vsel %vm3181, %v3180, %v3098
        %vm3190 = vcmask 523264
        %v3191 = vsel %vm3190, %v3182, %v3108
        %v3192 = vsel %vm3190, %v3183, %v3110
        %v3193 = vsel %vm3190, %v3184, %v3112
        %v3194 = vsel %vm3190, %v3185, %v3114
        %v3195 = vsel %vm3190, %v3186, %v3116
        %v3196 = vsel %vm3190, %v3187, %v3118
        %v3197 = vsel %vm3190, %v3188, %v3120
        %v3198 = vsel %vm3190, %v3189, %v3122
        %v3199 = vld [vmem:[%s4] sm:$0xff]
        %vm3200 = vcmask 588800
        %v3202 = vsel %vm3200, %v3199, 0
        %v3205 = vsel %vm3200, %v3191, 0
        %v3208 = vsel %vm3200, %v3192, 0
        %v3211 = vsel %vm3200, %v3193, 0
        %v3214 = vsel %vm3200, %v3194, 0
        %v3217 = vsel %vm3200, %v3195, 0
        %v3220 = vsel %vm3200, %v3196, 0
        %v3223 = vsel %vm3200, %v3197, 0
        %v3226 = vsel %vm3200, %v3198, 0
        %3228 = vmatprep.subr.mxu0 0.0
        %3229 = vmatpush1.xpose.msra.mxu0 0.0
        %3230 = vmatprep.subr.mxu0 0.0
        %3231 = vmatpush1.xpose.msra.mxu0 0.0
        %3232 = vmatprep.subr.mxu0 0.0
        %3233 = vmatpush1.xpose.msra.mxu0 0.0
        %3234 = vmatprep.subr.mxu0 0.0
        %3235 = vmatpush1.xpose.msra.mxu0 0.0
        %3236 = vmatprep.subr.mxu0 0.0
        %3237 = vmatpush1.xpose.msra.mxu0 0.0
        %3238 = vmatprep.subr.mxu0 0.0
        %3239 = vmatpush1.xpose.msra.mxu0 0.0
        %3240 = vmatprep.subr.mxu0 0.0
        %3241 = vmatpush1.xpose.msra.mxu0 0.0
        %3242 = vmatprep.subr.mxu0 0.0
        %3243 = vmatpush1.xpose.msra.mxu0 0.0
        %3244 = vmatprep.subr.mxu0 0.0
        %3245 = vmatpush1.xpose.msra.mxu0 %v3226
        %3246 = vmatprep.subr.mxu0 0.0
        %3247 = vmatpush1.xpose.msra.mxu0 %v3223
        %3248 = vmatprep.subr.mxu0 0.0
        %3249 = vmatpush1.xpose.msra.mxu0 %v3220
        %3250 = vmatprep.subr.mxu0 0.0
        %3251 = vmatpush1.xpose.msra.mxu0 %v3217
        %3252 = vmatprep.subr.mxu0 0.0
        %3253 = vmatpush1.xpose.msra.mxu0 %v3214
        %3254 = vmatprep.subr.mxu0 0.0
        %3255 = vmatpush1.xpose.msra.mxu0 %v3211
        %3256 = vmatprep.subr.mxu0 0.0
        %3257 = vmatpush1.xpose.msra.mxu0 %v3208
        %3258 = vmatprep.subr.mxu0 0.0
        %3259 = vmatpush1.xpose.msra.mxu0 %v3205
        %3260 = vmatprep.subr.mxu0 0.0
        %3261 = vmatpush2.xpose.msra.mxu0 0.0
        %3262 = vmatprep.subr.mxu0 0.0
        %3263 = vmatpush2.xpose.msra.mxu0 0.0
        %3264 = vmatprep.subr.mxu0 0.0
        %3265 = vmatpush2.xpose.msra.mxu0 0.0
        %3266 = vmatprep.subr.mxu0 0.0
        %3267 = vmatpush2.xpose.msra.mxu0 0.0
        %3268 = vmatprep.subr.mxu0 0.0
        %3269 = vmatpush2.xpose.msra.mxu0 0.0
        %3270 = vmatprep.subr.mxu0 0.0
        %3271 = vmatpush2.xpose.msra.mxu0 0.0
        %3272 = vmatprep.subr.mxu0 0.0
        %3273 = vmatpush2.xpose.msra.mxu0 0.0
        %3274 = vmatprep.subr.mxu0 0.0
        %3275 = vmatpush2.xpose.msra.mxu0 0.0
        %3276 = vmatprep.subr.mxu0 0.0
        %3277 = vmatpush2.xpose.msra.mxu0 0.0
        %3278 = vmatprep.subr.mxu0 0.0
        %3279 = vmatpush2.xpose.msra.mxu0 0.0
        %3280 = vmatprep.subr.mxu0 0.0
        %3281 = vmatpush2.xpose.msra.mxu0 0.0
        %3282 = vmatprep.subr.mxu0 0.0
        %3283 = vmatpush2.xpose.msra.mxu0 0.0
        %3284 = vmatprep.subr.mxu0 0.0
        %3285 = vmatpush2.xpose.msra.mxu0 0.0
        %3286 = vmatprep.subr.mxu0 0.0
        %3287 = vmatpush2.xpose.msra.mxu0 0.0
        %3288 = vmatprep.subr.mxu0 0.0
        %3289 = vmatpush2.xpose.msra.mxu0 0.0
        %3290 = vmatprep.subr.mxu0 0.0
        %3291 = vmatpush2.xpose.msra.mxu0 0.0
        %3292 = vmatprep.mubr.f32.mxu0 0.0
        %3293 = vmatmul.mubr.f32.gmra.mxu0 %v3202
        %v3294 = vpop.f32.mrf.mxu0
        %v3295 = vadd.f32 0.0, %v3294
        %v3296 = vpop.f32.mrf.mxu0
        %3297 = vdwg.mxu0
        %v3298 = vld [vmem:[%s5] sm:$0xff]
        %3300 = vset.pattern.permute.xlu0 0
        %3301 = vperm.xlu0 %3300, %v3298
        %v3302 = vpop.permute.xlu0 %3301
        %v3304 = vmul.f32 %v3295, %v3302
        %v3305 = vld [vmem:[%s6] sm:$0xff]
        %3307 = vset.pattern.permute.xlu0 0
        %3308 = vperm.xlu0 %3307, %v3305
        %v3309 = vpop.permute.xlu0 %3308
        %v3311 = vadd.f32 %v3304, %v3309
        %v3312 = vmax.f32 %v3311, 0.0
        %3313 = vst.msk [vmem:[%s271] sm:$0xff] %vm3190, %v3312
        %s3314 = sand.u32 %s181, 1
        %s3315 = scalar_lea.sflag [#allocation5], %s3314
        %s3316 = sand.u32 %s181, 1
        %s3317 = smul.addr %s3316, 8
        %s3318 = scalar_lea.vmem [#allocation4], %s3317
        // Predicated region
        $region49: #{tpu_custom_call.1} parent=47 // pred_check
          %p3319 = pneg %p191
        $region50: #{tpu_custom_call.1} parent=47 // pred_check_branch
          %3321 = sbr.rel (%p3319) target = $region52
        $region51: #{tpu_custom_call.1} parent=47 // pred_region
          %s3323 = ssub.s32 128, 128
          %3324 = vsyncadd %s3315, %s3323
          %s3325 = smul.addr %s21, 128
          %s3326 = scalar_lea.hbm %s7, %s3325
          %s3328 = sshll.u32 %s3318, 4
          %s3329 = int_to_ptr.vmem [resolvable:$true] %s3328
          %3331 = dma.vmem_to_hbm [thread:$0]  %s3329, 128, %s3326, %s3315
        $region52: #{tpu_custom_call.1} parent=47 // pred_fallthru
          _
      $region48: #{tpu_custom_call.1} parent=5 // pred_fallthru
        _
      %p3332 = scmp.le.s32.totalorder 2, %s16
      // Predicated region
      $region53: #{tpu_custom_call.1} parent=5 // pred_check
        %p3333 = pneg %p3332
      $region54: #{tpu_custom_call.1} parent=5 // pred_check_branch
        %3335 = sbr.rel (%p3333) target = $region56
      $region55: #{tpu_custom_call.1} parent=5 // pred_region
        %s3336 = ssub.s32 %s16, 2
        // Predicated region
        $region57: #{tpu_custom_call.1} parent=55 // pred_check
          %p3337 = pneg %p197
        $region58: #{tpu_custom_call.1} parent=55 // pred_check_branch
          %3339 = sbr.rel (%p3337) target = $region60
        $region59: #{tpu_custom_call.1} parent=55 // pred_region
          %s3340 = sand.u32 %s182, 1
          %s3341 = scalar_lea.sflag [#allocation5], %s3340
          %s3342 = sand.u32 %s182, 1
          %s3343 = smul.addr %s3342, 8
          %s3344 = scalar_lea.vmem [#allocation4], %s3343
          %3345 = dma.done %s3341, 128
        $region60: #{tpu_custom_call.1} parent=55 // pred_fallthru
          _
      $region56: #{tpu_custom_call.1} parent=5 // pred_fallthru
        _
    $region6: #{tpu_custom_call.1} parent=1 // loop_footer
      %s20 = sadd.s32 1, %s16
    $region7: #{tpu_custom_call.1} parent=1 // loop_footer_branch
      %15 = sbr.rel target = $region3
    $region8: #{tpu_custom_call.1} parent=1 // loop_exit
      _
    %3346 = vsyncpa [#allocation5], 1
    %s3347 = scalar_lea.sflag [#allocation5], 1
    %3348 = vsyncpa %s3347, 1

</llo_original>
